<compile_context>
chip_gen: v6e
topology: v6e:2x2x1
jax: 0.10.0
libtpu: 0.0.40
codegen_flags: <defaults>
</compile_context>

<pallas_src>
import functools

import numpy as np

import jax
import jax.numpy as jnp
from jax import lax
from jax.experimental import pallas as pl
from jax.experimental.pallas import tpu as pltpu


def _spatial_attention_kernel(w_ref, masks_ref, x_ref, o_ref, sum_ref, max_ref,
                              *, C, H, W, K, TC, has_pad):
    """Grid = (batch blocks, channel chunks)  [channel = reduction axis, last].

    w_ref     : SMEM (2*K*K,) f32   conv weight (avg channel pre-scaled by 1/C),
                                    idx = c*K*K + ky*K + kx
    masks_ref : VMEM (2*K, HW) f32  rows 0..K-1: column masks (per dx),
                                    rows K..2K-1: row masks (per dy)
    x_ref     : VMEM (TB, TC, HW)   one channel chunk of TB batch rows
    o_ref     : VMEM (TB, HW)       sigmoid(conv([avg, max]))
    sum_ref   : VMEM (TB, HW) f32   running channel sum (scratch)
    max_ref   : VMEM (TB, HW) f32   running channel max (scratch)
    """
    HW = H * W
    P = (K - 1) // 2
    k = pl.program_id(1)
    nk = pl.num_programs(1)

    # ---- channel-chunk partial reduction (every grid step) ----
    xb = x_ref[...]                                            # (TB, TC, HW)
    # Zero-padded channels contribute 0 to the sum -> no masking needed here,
    # and no full-block f32 temporary is materialized (accumulate in f32).
    part_sum = jnp.sum(xb, axis=1, dtype=jnp.float32)          # (TB, HW)

    if has_pad:
        # Mask padded channels out of the max with the dtype minimum so that
        # all-negative inputs are not corrupted by the zero channel padding.
        if jnp.issubdtype(xb.dtype, jnp.floating):
            fill = jnp.finfo(xb.dtype).min
        else:
            fill = jnp.iinfo(xb.dtype).min
        neg = jnp.array(fill, dtype=xb.dtype)
        ch = lax.broadcasted_iota(jnp.int32, (TC, 1), 0)       # (TC, 1)
        valid = ch < (C - k * TC)                              # (TC, 1) bool
        xm = jnp.where(valid[None], xb, neg)                   # (TB, TC, HW)
    else:
        xm = xb
    part_max = jnp.max(xm, axis=1).astype(jnp.float32)         # (TB, HW)

    @pl.when(k == 0)
    def _init():
        sum_ref[...] = part_sum
        max_ref[...] = part_max

    @pl.when(k > 0)
    def _accumulate():
        sum_ref[...] = sum_ref[...] + part_sum
        max_ref[...] = jnp.maximum(max_ref[...], part_max)

    # ---- KxK conv (2->1 channels) + sigmoid on the last channel chunk ----
    @pl.when(k == nk - 1)
    def _finalize():
        # 1/C is folded into the avg-channel weights -> feed the raw sum.
        planes = (sum_ref[...], max_ref[...])                  # ch 0 = avg*C, 1 = max
        shape = planes[0].shape                                # (TB, HW)

        # Host-precomputed 0/1 boundary masks (no in-kernel int div/rem).
        cmask = [masks_ref[kx:kx + 1, :] for kx in range(K)]         # (1, HW)
        rmask = [masks_ref[K + ky:K + ky + 1, :] for ky in range(K)]  # (1, HW)

        # Hoist all 2*K*K scalar weight reads out of the accumulation loops.
        wv = [[[w_ref[c * K * K + ky * K + kx] for kx in range(K)]
               for ky in range(K)] for c in range(2)]

        acc = jnp.zeros(shape, jnp.float32)
        # Per-channel epilogue: only K pre-rolled planes (+acc/s) live at once,
        # so register pressure stays low even for larger H*W.
        for c in range(2):
            base = planes[c]
            shifted = []
            for kx in range(K):
                dx = kx - P
                if dx == 0:
                    shifted.append(base)
                else:
                    r = pltpu.roll(base, shift=(-dx) % HW, axis=1)
                    shifted.append(r * cmask[kx])
            for ky in range(K):
                dy = ky - P
                s = wv[c][ky][0] * shifted[0]
                for kx in range(1, K):
                    s = s + wv[c][ky][kx] * shifted[kx]
                if dy == 0:
                    acc = acc + s
                else:
                    r = pltpu.roll(s, shift=(-dy * W) % HW, axis=1)
                    acc = acc + r * rmask[ky]

        # Lane-dense store: last dim is H*W.
        o_ref[...] = jax.nn.sigmoid(acc).astype(o_ref.dtype)


def _round_up(a, b):
    return ((a + b - 1) // b) * b


def _default_vmem_limit_bytes():
    """Generation-aware VMEM budget: ~3/4 of physical per-core VMEM, capped."""
    phys = 64 * 1024 * 1024  # conservative fallback (v7x per-TensorCore)
    try:
        info = pltpu.get_tpu_info()
        phys = int(getattr(info, "vmem_capacity_bytes", phys)) or phys
    except Exception:
        pass
    # v7x (64 MiB phys) -> 48 MiB limit; v5e/v6e (128 MiB phys) -> 96 MiB limit.
    return int(max(32 * 1024 * 1024, min(phys * 3 // 4, 96 * 1024 * 1024)))


def spatial_attention(x, weight, kernel_size=7, *, channel_block_bytes=None,
                      vmem_limit_bytes=None):
    """x: (N, C, H, W); weight: (1, 2, K, K) conv weight (no bias)."""
    N, C, H, W = x.shape
    K = kernel_size
    P = (K - 1) // 2
    HW = H * W
    itemsize = x.dtype.itemsize
    sub = max(1, 32 // itemsize)  # sublane tile: 8 f32 / 16 bf16 / 32 int8

    if vmem_limit_bytes is None:
        vmem_limit_bytes = _default_vmem_limit_bytes()
    if channel_block_bytes is None:
        # ~12 MiB blocks on v7x (48 MiB budget), ~24 MiB on v5e/v6e (96 MiB).
        channel_block_bytes = min(32 * 1024 * 1024,
                                  max(4 * 1024 * 1024, vmem_limit_bytes // 4))

    # ---- batch blocking: full sublanes; >= 2 parallel grid steps when N > 8 --
    if N <= 8:
        tb, n_pad = N, N                 # single step, block = full array dim
    else:
        tb = 8
        n_pad = _round_up(N, tb)

    # ---- channel blocking: sublane-multiple tc, pad ragged C up to it --------
    cap = channel_block_bytes // max(1, tb * HW * itemsize)
    cap = max(sub, (cap // sub) * sub)
    tc = min(_round_up(C, sub), cap)
    c_pad = _round_up(C, tc)
    has_pad = c_pad != C

    # Wrapper-side layout: flatten (H, W) -> lane-dense H*W; zero-pad N / C.
    x_flat = x.reshape(N, C, HW)
    if n_pad != N or c_pad != C:
        x_flat = jnp.pad(x_flat, ((0, n_pad - N), (0, c_pad - C), (0, 0)))

    # Fold the 1/C mean scaling into the avg-channel conv weights (host side).
    w = weight.astype(jnp.float32) * jnp.array([1.0 / C, 1.0],
                                               jnp.float32).reshape(1, 2, 1, 1)
    w_flat = w.reshape(-1)                                          # (2*K*K,)

    # Host-precomputed 0/1 boundary masks (avoid in-kernel int div/rem).
    lane = np.arange(HW)
    col = lane % W
    row = lane // W
    col_masks = np.stack(
        [((col + dx >= 0) & (col + dx < W)).astype(np.float32)
         for dx in range(-P, P + 1)], axis=0)                       # (K, HW)
    row_masks = np.stack(
        [((row + dy >= 0) & (row + dy < H)).astype(np.float32)
         for dy in range(-P, P + 1)], axis=0)                       # (K, HW)
    masks = jnp.asarray(np.concatenate([col_masks, row_masks], axis=0))

    kernel = functools.partial(_spatial_attention_kernel, C=C, H=H, W=W, K=K,
                               TC=tc, has_pad=has_pad)

    nb = n_pad // tb
    nk = c_pad // tc

    cost = pl.CostEstimate(
        flops=int(2 * n_pad * c_pad * HW + 4 * n_pad * HW * K * K),
        transcendentals=int(n_pad * HW),
        bytes_accessed=int(n_pad * c_pad * HW * itemsize
                           + n_pad * HW * itemsize + masks.size * 4),
    )

    out_flat = pl.pallas_call(
        kernel,
        out_shape=jax.ShapeDtypeStruct((n_pad, HW), x.dtype),
        grid=(nb, nk),                       # channel (reduction) axis last
        in_specs=[
            # Conv weights: small, scalar-indexed -> SMEM, untiled.
            pl.BlockSpec(memory_space=pltpu.MemorySpace.SMEM),
            # Boundary masks: small constant VMEM block.
            pl.BlockSpec((2 * K, HW), lambda i, k: (0, 0)),
            # One (TB, TC, H*W) channel chunk per grid step (big, lane-dense).
            pl.BlockSpec((tb, tc, HW), lambda i, k: (i, k, 0)),
        ],
        out_specs=pl.BlockSpec((tb, HW), lambda i, k: (i, 0)),
        scratch_shapes=[
            pltpu.VMEM((tb, HW), jnp.float32),   # running channel sum
            pltpu.VMEM((tb, HW), jnp.float32),   # running channel max
        ],
        compiler_params=pltpu.CompilerParams(
            dimension_semantics=("parallel", "arbitrary"),
            vmem_limit_bytes=int(vmem_limit_bytes),
        ),
        cost_estimate=cost,
    )(w_flat, masks, x_flat)

    return out_flat[:N].reshape(N, 1, H, W)


def spatial_attention_ref(x, weight):
    """Pure-JAX reference (mirrors the PyTorch forward)."""
    avg_out = jnp.mean(x, axis=1, keepdims=True)
    max_out = jnp.max(x, axis=1, keepdims=True)
    x_cat = jnp.concatenate([avg_out, max_out], axis=1)  # (N, 2, H, W)
    K = weight.shape[-1]
    P = (K - 1) // 2
    y = lax.conv_general_dilated(
        x_cat, weight,
        window_strides=(1, 1),
        padding=((P, P), (P, P)),
        dimension_numbers=("NCHW", "OIHW", "NCHW"),
        precision=lax.Precision.HIGHEST,
    )
    return jax.nn.sigmoid(y)


if __name__ == "__main__":
    key = jax.random.PRNGKey(0)
    k_x, k_w, k_x2 = jax.random.split(key, 3)

    K = 7
    fan_in = 2 * K * K
    weight = jax.random.normal(k_w, (1, 2, K, K), dtype=jnp.float32) * (1.0 / fan_in) ** 0.5

    # Small shape (single grid step; exercises the ragged-C masked-max path
    # since C=4 is padded up to the 8-sublane channel block).
    N, C, H, W = 2, 4, 16, 16
    x = jax.random.normal(k_x, (N, C, H, W), dtype=jnp.float32)
    out = jax.block_until_ready(spatial_attention(x, weight, kernel_size=K))
    ref = spatial_attention_ref(x, weight)
    assert out.shape == (N, 1, H, W), out.shape
    assert jnp.allclose(out, ref, atol=1e-4, rtol=1e-4), (
        float(jnp.max(jnp.abs(out - ref))))

    # Exercise batch padding (N=10 -> 16, two parallel batch steps), multi-chunk
    # channel accumulation (C=20 -> 24 in chunks of 8), and the masked max on
    # strictly negative inputs (zero channel padding must not corrupt the max).
    N2, C2 = 10, 20
    x2 = -jnp.abs(jax.random.normal(k_x2, (N2, C2, H, W), dtype=jnp.float32)) - 0.1
    out2 = jax.block_until_ready(
        spatial_attention(x2, weight, kernel_size=K,
                          channel_block_bytes=64 * 1024))
    ref2 = spatial_attention_ref(x2, weight)
    assert out2.shape == (N2, 1, H, W), out2.shape
    assert jnp.allclose(out2, ref2, atol=1e-4, rtol=1e-4), (
        float(jnp.max(jnp.abs(out2 - ref2))))

    print("KERNEL_OK")
</pallas_src>

<mosaic_0001>
module attributes {stable_mosaic.version = 11 : i64} {
  func.func @_spatial_attention_kernel(%arg0: i32, %arg1: i32, %arg2: memref<98xf32, #tpu.memory_space<smem>>, %arg3: memref<14x256xf32, #tpu.memory_space<vmem>>, %arg4: memref<2x8x256xf32, #tpu.memory_space<vmem>>, %arg5: memref<2x256xf32, #tpu.memory_space<vmem>>, %arg6: memref<2x256xf32, #tpu.memory_space<vmem>>, %arg7: memref<2x256xf32, #tpu.memory_space<vmem>>) attributes {dimension_semantics = [#tpu.dimension_semantics<parallel>, #tpu.dimension_semantics<arbitrary>], iteration_bounds = array<i64: 1, 1>, scalar_prefetch = 0 : i64, scratch_operands = 2 : i64, tpu.core_type = #tpu.core_type<tc>, window_params = [{transform_indices = @transform_0, window_bounds = array<i64: 98>}, {pipeline_mode = #tpu.pipeline_mode<synchronous>, transform_indices = @transform_1, window_bounds = array<i64: 14, 256>}, {transform_indices = @transform_2, window_bounds = array<i64: 2, 8, 256>}, {transform_indices = @transform_3, window_bounds = array<i64: 2, 256>}]} {
    %c0 = arith.constant 0 : index
    %c0_0 = arith.constant 0 : index
    %c0_1 = arith.constant 0 : index
    %0 = vector.load %arg4[%c0, %c0_0, %c0_1] : memref<2x8x256xf32, #tpu.memory_space<vmem>>, vector<2x8x256xf32>
    %cst = arith.constant dense<0.000000e+00> : vector<2x256xf32>
    %1 = vector.multi_reduction <add>, %0, %cst [1] : vector<2x8x256xf32> to vector<2x256xf32>
    %2 = tpu.iota {dimensions = array<i32: 0>} : vector<8x1xi32>
    %c8_i32 = arith.constant 8 : i32
    %3 = arith.muli %arg1, %c8_i32 : i32
    %c4_i32 = arith.constant 4 : i32
    %4 = arith.subi %c4_i32, %3 : i32
    %5 = vector.broadcast %4 : i32 to vector<8x1xi32>
    %6 = arith.cmpi slt, %2, %5 : vector<8x1xi32>
    %7 = vector.shape_cast %6 : vector<8x1xi1> to vector<1x8x1xi1>
    %cst_2 = arith.constant -3.40282347E+38 : f32
    %8 = vector.shape_cast %7 : vector<1x8x1xi1> to vector<1x8x1xi1>
    %9 = vector.broadcast %8 : vector<1x8x1xi1> to vector<2x8x256xi1>
    %10 = vector.broadcast %cst_2 : f32 to vector<2x8x256xf32>
    %11 = arith.select %9, %0, %10 : vector<2x8x256xi1>, vector<2x8x256xf32>
    %cst_3 = arith.constant dense<0xFF800000> : vector<2x256xf32>
    %12 = vector.multi_reduction <maximumf>, %11, %cst_3 [1] : vector<2x8x256xf32> to vector<2x256xf32>
    %c0_i32 = arith.constant 0 : i32
    %13 = arith.cmpi eq, %arg1, %c0_i32 : i32
    %14 = arith.extui %13 : i1 to i32
    %c0_i32_4 = arith.constant 0 : i32
    %15 = arith.cmpi ne, %14, %c0_i32_4 : i32
    scf.if %15 {
      %c0_9 = arith.constant 0 : index
      %c0_10 = arith.constant 0 : index
      %22 = vector.load %arg6[%c0_9, %c0_10] : memref<2x256xf32, #tpu.memory_space<vmem>>, vector<2x256xf32>
      tpu.vector_store %arg6[%c0_9, %c0_10], %1 {strides = array<i32>} : memref<2x256xf32, #tpu.memory_space<vmem>>, vector<2x256xf32>,
      %c0_11 = arith.constant 0 : index
      %c0_12 = arith.constant 0 : index
      %23 = vector.load %arg7[%c0_11, %c0_12] : memref<2x256xf32, #tpu.memory_space<vmem>>, vector<2x256xf32>
      tpu.vector_store %arg7[%c0_11, %c0_12], %12 {strides = array<i32>} : memref<2x256xf32, #tpu.memory_space<vmem>>, vector<2x256xf32>,
    } else {
    }
    %c0_i32_5 = arith.constant 0 : i32
    %16 = arith.cmpi sgt, %arg1, %c0_i32_5 : i32
    %17 = arith.extui %16 : i1 to i32
    %c0_i32_6 = arith.constant 0 : i32
    %18 = arith.cmpi ne, %17, %c0_i32_6 : i32
    scf.if %18 {
      %c0_9 = arith.constant 0 : index
      %c0_10 = arith.constant 0 : index
      %22 = vector.load %arg6[%c0_9, %c0_10] : memref<2x256xf32, #tpu.memory_space<vmem>>, vector<2x256xf32>
      %23 = arith.addf %22, %1 : vector<2x256xf32>
      %c0_11 = arith.constant 0 : index
      %c0_12 = arith.constant 0 : index
      %24 = vector.load %arg6[%c0_11, %c0_12] : memref<2x256xf32, #tpu.memory_space<vmem>>, vector<2x256xf32>
      tpu.vector_store %arg6[%c0_11, %c0_12], %23 {strides = array<i32>} : memref<2x256xf32, #tpu.memory_space<vmem>>, vector<2x256xf32>,
      %c0_13 = arith.constant 0 : index
      %c0_14 = arith.constant 0 : index
      %25 = vector.load %arg7[%c0_13, %c0_14] : memref<2x256xf32, #tpu.memory_space<vmem>>, vector<2x256xf32>
      %26 = arith.maximumf %25, %12 : vector<2x256xf32>
      %c0_15 = arith.constant 0 : index
      %c0_16 = arith.constant 0 : index
      %27 = vector.load %arg7[%c0_15, %c0_16] : memref<2x256xf32, #tpu.memory_space<vmem>>, vector<2x256xf32>
      tpu.vector_store %arg7[%c0_15, %c0_16], %26 {strides = array<i32>} : memref<2x256xf32, #tpu.memory_space<vmem>>, vector<2x256xf32>,
    } else {
    }
    %c0_i32_7 = arith.constant 0 : i32
    %19 = arith.cmpi eq, %arg1, %c0_i32_7 : i32
    %20 = arith.extui %19 : i1 to i32
    %c0_i32_8 = arith.constant 0 : i32
    %21 = arith.cmpi ne, %20, %c0_i32_8 : i32
    scf.if %21 {
      %c0_9 = arith.constant 0 : index
      %c0_10 = arith.constant 0 : index
      %22 = vector.load %arg6[%c0_9, %c0_10] : memref<2x256xf32, #tpu.memory_space<vmem>>, vector<2x256xf32>
      %c0_11 = arith.constant 0 : index
      %c0_12 = arith.constant 0 : index
      %23 = vector.load %arg7[%c0_11, %c0_12] : memref<2x256xf32, #tpu.memory_space<vmem>>, vector<2x256xf32>
      %c0_13 = arith.constant 0 : index
      %c0_14 = arith.constant 0 : index
      %24 = vector.load %arg3[%c0_13, %c0_14] : memref<14x256xf32, #tpu.memory_space<vmem>>, vector<1x256xf32>
      %c1 = arith.constant 1 : index
      %c0_15 = arith.constant 0 : index
      %25 = vector.load %arg3[%c1, %c0_15] : memref<14x256xf32, #tpu.memory_space<vmem>>, vector<1x256xf32>
      %c2 = arith.constant 2 : index
      %c0_16 = arith.constant 0 : index
      %26 = vector.load %arg3[%c2, %c0_16] : memref<14x256xf32, #tpu.memory_space<vmem>>, vector<1x256xf32>
      %c4 = arith.constant 4 : index
      %c0_17 = arith.constant 0 : index
      %27 = vector.load %arg3[%c4, %c0_17] : memref<14x256xf32, #tpu.memory_space<vmem>>, vector<1x256xf32>
      %c5 = arith.constant 5 : index
      %c0_18 = arith.constant 0 : index
      %28 = vector.load %arg3[%c5, %c0_18] : memref<14x256xf32, #tpu.memory_space<vmem>>, vector<1x256xf32>
      %c6 = arith.constant 6 : index
      %c0_19 = arith.constant 0 : index
      %29 = vector.load %arg3[%c6, %c0_19] : memref<14x256xf32, #tpu.memory_space<vmem>>, vector<1x256xf32>
      %c7 = arith.constant 7 : index
      %c0_20 = arith.constant 0 : index
      %30 = vector.load %arg3[%c7, %c0_20] : memref<14x256xf32, #tpu.memory_space<vmem>>, vector<1x256xf32>
      %c8 = arith.constant 8 : index
      %c0_21 = arith.constant 0 : index
      %31 = vector.load %arg3[%c8, %c0_21] : memref<14x256xf32, #tpu.memory_space<vmem>>, vector<1x256xf32>
      %c9 = arith.constant 9 : index
      %c0_22 = arith.constant 0 : index
      %32 = vector.load %arg3[%c9, %c0_22] : memref<14x256xf32, #tpu.memory_space<vmem>>, vector<1x256xf32>
      %c11 = arith.constant 11 : index
      %c0_23 = arith.constant 0 : index
      %33 = vector.load %arg3[%c11, %c0_23] : memref<14x256xf32, #tpu.memory_space<vmem>>, vector<1x256xf32>
      %c12 = arith.constant 12 : index
      %c0_24 = arith.constant 0 : index
      %34 = vector.load %arg3[%c12, %c0_24] : memref<14x256xf32, #tpu.memory_space<vmem>>, vector<1x256xf32>
      %c13 = arith.constant 13 : index
      %c0_25 = arith.constant 0 : index
      %35 = vector.load %arg3[%c13, %c0_25] : memref<14x256xf32, #tpu.memory_space<vmem>>, vector<1x256xf32>
      %c0_26 = arith.constant 0 : index
      %36 = memref.load %arg2[%c0_26] : memref<98xf32, #tpu.memory_space<smem>>
      %c1_27 = arith.constant 1 : index
      %37 = memref.load %arg2[%c1_27] : memref<98xf32, #tpu.memory_space<smem>>
      %c2_28 = arith.constant 2 : index
      %38 = memref.load %arg2[%c2_28] : memref<98xf32, #tpu.memory_space<smem>>
      %c3 = arith.constant 3 : index
      %39 = memref.load %arg2[%c3] : memref<98xf32, #tpu.memory_space<smem>>
      %c4_29 = arith.constant 4 : index
      %40 = memref.load %arg2[%c4_29] : memref<98xf32, #tpu.memory_space<smem>>
      %c5_30 = arith.constant 5 : index
      %41 = memref.load %arg2[%c5_30] : memref<98xf32, #tpu.memory_space<smem>>
      %c6_31 = arith.constant 6 : index
      %42 = memref.load %arg2[%c6_31] : memref<98xf32, #tpu.memory_space<smem>>
      %c7_32 = arith.constant 7 : index
      %43 = memref.load %arg2[%c7_32] : memref<98xf32, #tpu.memory_space<smem>>
      %c8_33 = arith.constant 8 : index
      %44 = memref.load %arg2[%c8_33] : memref<98xf32, #tpu.memory_space<smem>>
      %c9_34 = arith.constant 9 : index
      %45 = memref.load %arg2[%c9_34] : memref<98xf32, #tpu.memory_space<smem>>
      %c10 = arith.constant 10 : index
      %46 = memref.load %arg2[%c10] : memref<98xf32, #tpu.memory_space<smem>>
      %c11_35 = arith.constant 11 : index
      %47 = memref.load %arg2[%c11_35] : memref<98xf32, #tpu.memory_space<smem>>
      %c12_36 = arith.constant 12 : index
      %48 = memref.load %arg2[%c12_36] : memref<98xf32, #tpu.memory_space<smem>>
      %c13_37 = arith.constant 13 : index
      %49 = memref.load %arg2[%c13_37] : memref<98xf32, #tpu.memory_space<smem>>
      %c14 = arith.constant 14 : index
      %50 = memref.load %arg2[%c14] : memref<98xf32, #tpu.memory_space<smem>>
      %c15 = arith.constant 15 : index
      %51 = memref.load %arg2[%c15] : memref<98xf32, #tpu.memory_space<smem>>
      %c16 = arith.constant 16 : index
      %52 = memref.load %arg2[%c16] : memref<98xf32, #tpu.memory_space<smem>>
      %c17 = arith.constant 17 : index
      %53 = memref.load %arg2[%c17] : memref<98xf32, #tpu.memory_space<smem>>
      %c18 = arith.constant 18 : index
      %54 = memref.load %arg2[%c18] : memref<98xf32, #tpu.memory_space<smem>>
      %c19 = arith.constant 19 : index
      %55 = memref.load %arg2[%c19] : memref<98xf32, #tpu.memory_space<smem>>
      %c20 = arith.constant 20 : index
      %56 = memref.load %arg2[%c20] : memref<98xf32, #tpu.memory_space<smem>>
      %c21 = arith.constant 21 : index
      %57 = memref.load %arg2[%c21] : memref<98xf32, #tpu.memory_space<smem>>
      %c22 = arith.constant 22 : index
      %58 = memref.load %arg2[%c22] : memref<98xf32, #tpu.memory_space<smem>>
      %c23 = arith.constant 23 : index
      %59 = memref.load %arg2[%c23] : memref<98xf32, #tpu.memory_space<smem>>
      %c24 = arith.constant 24 : index
      %60 = memref.load %arg2[%c24] : memref<98xf32, #tpu.memory_space<smem>>
      %c25 = arith.constant 25 : index
      %61 = memref.load %arg2[%c25] : memref<98xf32, #tpu.memory_space<smem>>
      %c26 = arith.constant 26 : index
      %62 = memref.load %arg2[%c26] : memref<98xf32, #tpu.memory_space<smem>>
      %c27 = arith.constant 27 : index
      %63 = memref.load %arg2[%c27] : memref<98xf32, #tpu.memory_space<smem>>
      %c28 = arith.constant 28 : index
      %64 = memref.load %arg2[%c28] : memref<98xf32, #tpu.memory_space<smem>>
      %c29 = arith.constant 29 : index
      %65 = memref.load %arg2[%c29] : memref<98xf32, #tpu.memory_space<smem>>
      %c30 = arith.constant 30 : index
      %66 = memref.load %arg2[%c30] : memref<98xf32, #tpu.memory_space<smem>>
      %c31 = arith.constant 31 : index
      %67 = memref.load %arg2[%c31] : memref<98xf32, #tpu.memory_space<smem>>
      %c32 = arith.constant 32 : index
      %68 = memref.load %arg2[%c32] : memref<98xf32, #tpu.memory_space<smem>>
      %c33 = arith.constant 33 : index
      %69 = memref.load %arg2[%c33] : memref<98xf32, #tpu.memory_space<smem>>
      %c34 = arith.constant 34 : index
      %70 = memref.load %arg2[%c34] : memref<98xf32, #tpu.memory_space<smem>>
      %c35 = arith.constant 35 : index
      %71 = memref.load %arg2[%c35] : memref<98xf32, #tpu.memory_space<smem>>
      %c36 = arith.constant 36 : index
      %72 = memref.load %arg2[%c36] : memref<98xf32, #tpu.memory_space<smem>>
      %c37 = arith.constant 37 : index
      %73 = memref.load %arg2[%c37] : memref<98xf32, #tpu.memory_space<smem>>
      %c38 = arith.constant 38 : index
      %74 = memref.load %arg2[%c38] : memref<98xf32, #tpu.memory_space<smem>>
      %c39 = arith.constant 39 : index
      %75 = memref.load %arg2[%c39] : memref<98xf32, #tpu.memory_space<smem>>
      %c40 = arith.constant 40 : index
      %76 = memref.load %arg2[%c40] : memref<98xf32, #tpu.memory_space<smem>>
      %c41 = arith.constant 41 : index
      %77 = memref.load %arg2[%c41] : memref<98xf32, #tpu.memory_space<smem>>
      %c42 = arith.constant 42 : index
      %78 = memref.load %arg2[%c42] : memref<98xf32, #tpu.memory_space<smem>>
      %c43 = arith.constant 43 : index
      %79 = memref.load %arg2[%c43] : memref<98xf32, #tpu.memory_space<smem>>
      %c44 = arith.constant 44 : index
      %80 = memref.load %arg2[%c44] : memref<98xf32, #tpu.memory_space<smem>>
      %c45 = arith.constant 45 : index
      %81 = memref.load %arg2[%c45] : memref<98xf32, #tpu.memory_space<smem>>
      %c46 = arith.constant 46 : index
      %82 = memref.load %arg2[%c46] : memref<98xf32, #tpu.memory_space<smem>>
      %c47 = arith.constant 47 : index
      %83 = memref.load %arg2[%c47] : memref<98xf32, #tpu.memory_space<smem>>
      %c48 = arith.constant 48 : index
      %84 = memref.load %arg2[%c48] : memref<98xf32, #tpu.memory_space<smem>>
      %c49 = arith.constant 49 : index
      %85 = memref.load %arg2[%c49] : memref<98xf32, #tpu.memory_space<smem>>
      %c50 = arith.constant 50 : index
      %86 = memref.load %arg2[%c50] : memref<98xf32, #tpu.memory_space<smem>>
      %c51 = arith.constant 51 : index
      %87 = memref.load %arg2[%c51] : memref<98xf32, #tpu.memory_space<smem>>
      %c52 = arith.constant 52 : index
      %88 = memref.load %arg2[%c52] : memref<98xf32, #tpu.memory_space<smem>>
      %c53 = arith.constant 53 : index
      %89 = memref.load %arg2[%c53] : memref<98xf32, #tpu.memory_space<smem>>
      %c54 = arith.constant 54 : index
      %90 = memref.load %arg2[%c54] : memref<98xf32, #tpu.memory_space<smem>>
      %c55 = arith.constant 55 : index
      %91 = memref.load %arg2[%c55] : memref<98xf32, #tpu.memory_space<smem>>
      %c56 = arith.constant 56 : index
      %92 = memref.load %arg2[%c56] : memref<98xf32, #tpu.memory_space<smem>>
      %c57 = arith.constant 57 : index
      %93 = memref.load %arg2[%c57] : memref<98xf32, #tpu.memory_space<smem>>
      %c58 = arith.constant 58 : index
      %94 = memref.load %arg2[%c58] : memref<98xf32, #tpu.memory_space<smem>>
      %c59 = arith.constant 59 : index
      %95 = memref.load %arg2[%c59] : memref<98xf32, #tpu.memory_space<smem>>
      %c60 = arith.constant 60 : index
      %96 = memref.load %arg2[%c60] : memref<98xf32, #tpu.memory_space<smem>>
      %c61 = arith.constant 61 : index
      %97 = memref.load %arg2[%c61] : memref<98xf32, #tpu.memory_space<smem>>
      %c62 = arith.constant 62 : index
      %98 = memref.load %arg2[%c62] : memref<98xf32, #tpu.memory_space<smem>>
      %c63 = arith.constant 63 : index
      %99 = memref.load %arg2[%c63] : memref<98xf32, #tpu.memory_space<smem>>
      %c64 = arith.constant 64 : index
      %100 = memref.load %arg2[%c64] : memref<98xf32, #tpu.memory_space<smem>>
      %c65 = arith.constant 65 : index
      %101 = memref.load %arg2[%c65] : memref<98xf32, #tpu.memory_space<smem>>
      %c66 = arith.constant 66 : index
      %102 = memref.load %arg2[%c66] : memref<98xf32, #tpu.memory_space<smem>>
      %c67 = arith.constant 67 : index
      %103 = memref.load %arg2[%c67] : memref<98xf32, #tpu.memory_space<smem>>
      %c68 = arith.constant 68 : index
      %104 = memref.load %arg2[%c68] : memref<98xf32, #tpu.memory_space<smem>>
      %c69 = arith.constant 69 : index
      %105 = memref.load %arg2[%c69] : memref<98xf32, #tpu.memory_space<smem>>
      %c70 = arith.constant 70 : index
      %106 = memref.load %arg2[%c70] : memref<98xf32, #tpu.memory_space<smem>>
      %c71 = arith.constant 71 : index
      %107 = memref.load %arg2[%c71] : memref<98xf32, #tpu.memory_space<smem>>
      %c72 = arith.constant 72 : index
      %108 = memref.load %arg2[%c72] : memref<98xf32, #tpu.memory_space<smem>>
      %c73 = arith.constant 73 : index
      %109 = memref.load %arg2[%c73] : memref<98xf32, #tpu.memory_space<smem>>
      %c74 = arith.constant 74 : index
      %110 = memref.load %arg2[%c74] : memref<98xf32, #tpu.memory_space<smem>>
      %c75 = arith.constant 75 : index
      %111 = memref.load %arg2[%c75] : memref<98xf32, #tpu.memory_space<smem>>
      %c76 = arith.constant 76 : index
      %112 = memref.load %arg2[%c76] : memref<98xf32, #tpu.memory_space<smem>>
      %c77 = arith.constant 77 : index
      %113 = memref.load %arg2[%c77] : memref<98xf32, #tpu.memory_space<smem>>
      %c78 = arith.constant 78 : index
      %114 = memref.load %arg2[%c78] : memref<98xf32, #tpu.memory_space<smem>>
      %c79 = arith.constant 79 : index
      %115 = memref.load %arg2[%c79] : memref<98xf32, #tpu.memory_space<smem>>
      %c80 = arith.constant 80 : index
      %116 = memref.load %arg2[%c80] : memref<98xf32, #tpu.memory_space<smem>>
      %c81 = arith.constant 81 : index
      %117 = memref.load %arg2[%c81] : memref<98xf32, #tpu.memory_space<smem>>
      %c82 = arith.constant 82 : index
      %118 = memref.load %arg2[%c82] : memref<98xf32, #tpu.memory_space<smem>>
      %c83 = arith.constant 83 : index
      %119 = memref.load %arg2[%c83] : memref<98xf32, #tpu.memory_space<smem>>
      %c84 = arith.constant 84 : index
      %120 = memref.load %arg2[%c84] : memref<98xf32, #tpu.memory_space<smem>>
      %c85 = arith.constant 85 : index
      %121 = memref.load %arg2[%c85] : memref<98xf32, #tpu.memory_space<smem>>
      %c86 = arith.constant 86 : index
      %122 = memref.load %arg2[%c86] : memref<98xf32, #tpu.memory_space<smem>>
      %c87 = arith.constant 87 : index
      %123 = memref.load %arg2[%c87] : memref<98xf32, #tpu.memory_space<smem>>
      %c88 = arith.constant 88 : index
      %124 = memref.load %arg2[%c88] : memref<98xf32, #tpu.memory_space<smem>>
      %c89 = arith.constant 89 : index
      %125 = memref.load %arg2[%c89] : memref<98xf32, #tpu.memory_space<smem>>
      %c90 = arith.constant 90 : index
      %126 = memref.load %arg2[%c90] : memref<98xf32, #tpu.memory_space<smem>>
      %c91 = arith.constant 91 : index
      %127 = memref.load %arg2[%c91] : memref<98xf32, #tpu.memory_space<smem>>
      %c92 = arith.constant 92 : index
      %128 = memref.load %arg2[%c92] : memref<98xf32, #tpu.memory_space<smem>>
      %c93 = arith.constant 93 : index
      %129 = memref.load %arg2[%c93] : memref<98xf32, #tpu.memory_space<smem>>
      %c94 = arith.constant 94 : index
      %130 = memref.load %arg2[%c94] : memref<98xf32, #tpu.memory_space<smem>>
      %c95 = arith.constant 95 : index
      %131 = memref.load %arg2[%c95] : memref<98xf32, #tpu.memory_space<smem>>
      %c96 = arith.constant 96 : index
      %132 = memref.load %arg2[%c96] : memref<98xf32, #tpu.memory_space<smem>>
      %c97 = arith.constant 97 : index
      %133 = memref.load %arg2[%c97] : memref<98xf32, #tpu.memory_space<smem>>
      %cst_38 = arith.constant 0.000000e+00 : f32
      %134 = vector.broadcast %cst_38 : f32 to vector<2x256xf32>
      %c3_i32 = arith.constant 3 : i32
      %135 = tpu.dynamic_rotate %22 by %c3_i32 dim 1 : vector<2x256xf32>, i32 -> vector<2x256xf32>
      %136 = vector.broadcast %24 : vector<1x256xf32> to vector<2x256xf32>
      %137 = arith.mulf %135, %136 : vector<2x256xf32>
      %c2_i32 = arith.constant 2 : i32
      %138 = tpu.dynamic_rotate %22 by %c2_i32 dim 1 : vector<2x256xf32>, i32 -> vector<2x256xf32>
      %139 = vector.broadcast %25 : vector<1x256xf32> to vector<2x256xf32>
      %140 = arith.mulf %138, %139 : vector<2x256xf32>
      %c1_i32 = arith.constant 1 : i32
      %141 = tpu.dynamic_rotate %22 by %c1_i32 dim 1 : vector<2x256xf32>, i32 -> vector<2x256xf32>
      %142 = vector.broadcast %26 : vector<1x256xf32> to vector<2x256xf32>
      %143 = arith.mulf %141, %142 : vector<2x256xf32>
      %c255_i32 = arith.constant 255 : i32
      %144 = tpu.dynamic_rotate %22 by %c255_i32 dim 1 : vector<2x256xf32>, i32 -> vector<2x256xf32>
      %145 = vector.broadcast %27 : vector<1x256xf32> to vector<2x256xf32>
      %146 = arith.mulf %144, %145 : vector<2x256xf32>
      %c254_i32 = arith.constant 254 : i32
      %147 = tpu.dynamic_rotate %22 by %c254_i32 dim 1 : vector<2x256xf32>, i32 -> vector<2x256xf32>
      %148 = vector.broadcast %28 : vector<1x256xf32> to vector<2x256xf32>
      %149 = arith.mulf %147, %148 : vector<2x256xf32>
      %c253_i32 = arith.constant 253 : i32
      %150 = tpu.dynamic_rotate %22 by %c253_i32 dim 1 : vector<2x256xf32>, i32 -> vector<2x256xf32>
      %151 = vector.broadcast %29 : vector<1x256xf32> to vector<2x256xf32>
      %152 = arith.mulf %150, %151 : vector<2x256xf32>
      %153 = vector.broadcast %36 : f32 to vector<2x256xf32>
      %154 = arith.mulf %153, %137 : vector<2x256xf32>
      %155 = vector.broadcast %37 : f32 to vector<2x256xf32>
      %156 = arith.mulf %155, %140 : vector<2x256xf32>
      %157 = arith.addf %154, %156 : vector<2x256xf32>
      %158 = vector.broadcast %38 : f32 to vector<2x256xf32>
      %159 = arith.mulf %158, %143 : vector<2x256xf32>
      %160 = arith.addf %157, %159 : vector<2x256xf32>
      %161 = vector.broadcast %39 : f32 to vector<2x256xf32>
      %162 = arith.mulf %161, %22 : vector<2x256xf32>
      %163 = arith.addf %160, %162 : vector<2x256xf32>
      %164 = vector.broadcast %40 : f32 to vector<2x256xf32>
      %165 = arith.mulf %164, %146 : vector<2x256xf32>
      %166 = arith.addf %163, %165 : vector<2x256xf32>
      %167 = vector.broadcast %41 : f32 to vector<2x256xf32>
      %168 = arith.mulf %167, %149 : vector<2x256xf32>
      %169 = arith.addf %166, %168 : vector<2x256xf32>
      %170 = vector.broadcast %42 : f32 to vector<2x256xf32>
      %171 = arith.mulf %170, %152 : vector<2x256xf32>
      %172 = arith.addf %169, %171 : vector<2x256xf32>
      %c48_i32 = arith.constant 48 : i32
      %173 = tpu.dynamic_rotate %172 by %c48_i32 dim 1 : vector<2x256xf32>, i32 -> vector<2x256xf32>
      %174 = vector.broadcast %30 : vector<1x256xf32> to vector<2x256xf32>
      %175 = arith.mulf %173, %174 : vector<2x256xf32>
      %176 = arith.addf %134, %175 : vector<2x256xf32>
      %177 = vector.broadcast %43 : f32 to vector<2x256xf32>
      %178 = arith.mulf %177, %137 : vector<2x256xf32>
      %179 = vector.broadcast %44 : f32 to vector<2x256xf32>
      %180 = arith.mulf %179, %140 : vector<2x256xf32>
      %181 = arith.addf %178, %180 : vector<2x256xf32>
      %182 = vector.broadcast %45 : f32 to vector<2x256xf32>
      %183 = arith.mulf %182, %143 : vector<2x256xf32>
      %184 = arith.addf %181, %183 : vector<2x256xf32>
      %185 = vector.broadcast %46 : f32 to vector<2x256xf32>
      %186 = arith.mulf %185, %22 : vector<2x256xf32>
      %187 = arith.addf %184, %186 : vector<2x256xf32>
      %188 = vector.broadcast %47 : f32 to vector<2x256xf32>
      %189 = arith.mulf %188, %146 : vector<2x256xf32>
      %190 = arith.addf %187, %189 : vector<2x256xf32>
      %191 = vector.broadcast %48 : f32 to vector<2x256xf32>
      %192 = arith.mulf %191, %149 : vector<2x256xf32>
      %193 = arith.addf %190, %192 : vector<2x256xf32>
      %194 = vector.broadcast %49 : f32 to vector<2x256xf32>
      %195 = arith.mulf %194, %152 : vector<2x256xf32>
      %196 = arith.addf %193, %195 : vector<2x256xf32>
      %c32_i32 = arith.constant 32 : i32
      %197 = tpu.dynamic_rotate %196 by %c32_i32 dim 1 : vector<2x256xf32>, i32 -> vector<2x256xf32>
      %198 = vector.broadcast %31 : vector<1x256xf32> to vector<2x256xf32>
      %199 = arith.mulf %197, %198 : vector<2x256xf32>
      %200 = arith.addf %176, %199 : vector<2x256xf32>
      %201 = vector.broadcast %50 : f32 to vector<2x256xf32>
      %202 = arith.mulf %201, %137 : vector<2x256xf32>
      %203 = vector.broadcast %51 : f32 to vector<2x256xf32>
      %204 = arith.mulf %203, %140 : vector<2x256xf32>
      %205 = arith.addf %202, %204 : vector<2x256xf32>
      %206 = vector.broadcast %52 : f32 to vector<2x256xf32>
      %207 = arith.mulf %206, %143 : vector<2x256xf32>
      %208 = arith.addf %205, %207 : vector<2x256xf32>
      %209 = vector.broadcast %53 : f32 to vector<2x256xf32>
      %210 = arith.mulf %209, %22 : vector<2x256xf32>
      %211 = arith.addf %208, %210 : vector<2x256xf32>
      %212 = vector.broadcast %54 : f32 to vector<2x256xf32>
      %213 = arith.mulf %212, %146 : vector<2x256xf32>
      %214 = arith.addf %211, %213 : vector<2x256xf32>
      %215 = vector.broadcast %55 : f32 to vector<2x256xf32>
      %216 = arith.mulf %215, %149 : vector<2x256xf32>
      %217 = arith.addf %214, %216 : vector<2x256xf32>
      %218 = vector.broadcast %56 : f32 to vector<2x256xf32>
      %219 = arith.mulf %218, %152 : vector<2x256xf32>
      %220 = arith.addf %217, %219 : vector<2x256xf32>
      %c16_i32 = arith.constant 16 : i32
      %221 = tpu.dynamic_rotate %220 by %c16_i32 dim 1 : vector<2x256xf32>, i32 -> vector<2x256xf32>
      %222 = vector.broadcast %32 : vector<1x256xf32> to vector<2x256xf32>
      %223 = arith.mulf %221, %222 : vector<2x256xf32>
      %224 = arith.addf %200, %223 : vector<2x256xf32>
      %225 = vector.broadcast %57 : f32 to vector<2x256xf32>
      %226 = arith.mulf %225, %137 : vector<2x256xf32>
      %227 = vector.broadcast %58 : f32 to vector<2x256xf32>
      %228 = arith.mulf %227, %140 : vector<2x256xf32>
      %229 = arith.addf %226, %228 : vector<2x256xf32>
      %230 = vector.broadcast %59 : f32 to vector<2x256xf32>
      %231 = arith.mulf %230, %143 : vector<2x256xf32>
      %232 = arith.addf %229, %231 : vector<2x256xf32>
      %233 = vector.broadcast %60 : f32 to vector<2x256xf32>
      %234 = arith.mulf %233, %22 : vector<2x256xf32>
      %235 = arith.addf %232, %234 : vector<2x256xf32>
      %236 = vector.broadcast %61 : f32 to vector<2x256xf32>
      %237 = arith.mulf %236, %146 : vector<2x256xf32>
      %238 = arith.addf %235, %237 : vector<2x256xf32>
      %239 = vector.broadcast %62 : f32 to vector<2x256xf32>
      %240 = arith.mulf %239, %149 : vector<2x256xf32>
      %241 = arith.addf %238, %240 : vector<2x256xf32>
      %242 = vector.broadcast %63 : f32 to vector<2x256xf32>
      %243 = arith.mulf %242, %152 : vector<2x256xf32>
      %244 = arith.addf %241, %243 : vector<2x256xf32>
      %245 = arith.addf %224, %244 : vector<2x256xf32>
      %246 = vector.broadcast %64 : f32 to vector<2x256xf32>
      %247 = arith.mulf %246, %137 : vector<2x256xf32>
      %248 = vector.broadcast %65 : f32 to vector<2x256xf32>
      %249 = arith.mulf %248, %140 : vector<2x256xf32>
      %250 = arith.addf %247, %249 : vector<2x256xf32>
      %251 = vector.broadcast %66 : f32 to vector<2x256xf32>
      %252 = arith.mulf %251, %143 : vector<2x256xf32>
      %253 = arith.addf %250, %252 : vector<2x256xf32>
      %254 = vector.broadcast %67 : f32 to vector<2x256xf32>
      %255 = arith.mulf %254, %22 : vector<2x256xf32>
      %256 = arith.addf %253, %255 : vector<2x256xf32>
      %257 = vector.broadcast %68 : f32 to vector<2x256xf32>
      %258 = arith.mulf %257, %146 : vector<2x256xf32>
      %259 = arith.addf %256, %258 : vector<2x256xf32>
      %260 = vector.broadcast %69 : f32 to vector<2x256xf32>
      %261 = arith.mulf %260, %149 : vector<2x256xf32>
      %262 = arith.addf %259, %261 : vector<2x256xf32>
      %263 = vector.broadcast %70 : f32 to vector<2x256xf32>
      %264 = arith.mulf %263, %152 : vector<2x256xf32>
      %265 = arith.addf %262, %264 : vector<2x256xf32>
      %c240_i32 = arith.constant 240 : i32
      %266 = tpu.dynamic_rotate %265 by %c240_i32 dim 1 : vector<2x256xf32>, i32 -> vector<2x256xf32>
      %267 = vector.broadcast %33 : vector<1x256xf32> to vector<2x256xf32>
      %268 = arith.mulf %266, %267 : vector<2x256xf32>
      %269 = arith.addf %245, %268 : vector<2x256xf32>
      %270 = vector.broadcast %71 : f32 to vector<2x256xf32>
      %271 = arith.mulf %270, %137 : vector<2x256xf32>
      %272 = vector.broadcast %72 : f32 to vector<2x256xf32>
      %273 = arith.mulf %272, %140 : vector<2x256xf32>
      %274 = arith.addf %271, %273 : vector<2x256xf32>
      %275 = vector.broadcast %73 : f32 to vector<2x256xf32>
      %276 = arith.mulf %275, %143 : vector<2x256xf32>
      %277 = arith.addf %274, %276 : vector<2x256xf32>
      %278 = vector.broadcast %74 : f32 to vector<2x256xf32>
      %279 = arith.mulf %278, %22 : vector<2x256xf32>
      %280 = arith.addf %277, %279 : vector<2x256xf32>
      %281 = vector.broadcast %75 : f32 to vector<2x256xf32>
      %282 = arith.mulf %281, %146 : vector<2x256xf32>
      %283 = arith.addf %280, %282 : vector<2x256xf32>
      %284 = vector.broadcast %76 : f32 to vector<2x256xf32>
      %285 = arith.mulf %284, %149 : vector<2x256xf32>
      %286 = arith.addf %283, %285 : vector<2x256xf32>
      %287 = vector.broadcast %77 : f32 to vector<2x256xf32>
      %288 = arith.mulf %287, %152 : vector<2x256xf32>
      %289 = arith.addf %286, %288 : vector<2x256xf32>
      %c224_i32 = arith.constant 224 : i32
      %290 = tpu.dynamic_rotate %289 by %c224_i32 dim 1 : vector<2x256xf32>, i32 -> vector<2x256xf32>
      %291 = vector.broadcast %34 : vector<1x256xf32> to vector<2x256xf32>
      %292 = arith.mulf %290, %291 : vector<2x256xf32>
      %293 = arith.addf %269, %292 : vector<2x256xf32>
      %294 = vector.broadcast %78 : f32 to vector<2x256xf32>
      %295 = arith.mulf %294, %137 : vector<2x256xf32>
      %296 = vector.broadcast %79 : f32 to vector<2x256xf32>
      %297 = arith.mulf %296, %140 : vector<2x256xf32>
      %298 = arith.addf %295, %297 : vector<2x256xf32>
      %299 = vector.broadcast %80 : f32 to vector<2x256xf32>
      %300 = arith.mulf %299, %143 : vector<2x256xf32>
      %301 = arith.addf %298, %300 : vector<2x256xf32>
      %302 = vector.broadcast %81 : f32 to vector<2x256xf32>
      %303 = arith.mulf %302, %22 : vector<2x256xf32>
      %304 = arith.addf %301, %303 : vector<2x256xf32>
      %305 = vector.broadcast %82 : f32 to vector<2x256xf32>
      %306 = arith.mulf %305, %146 : vector<2x256xf32>
      %307 = arith.addf %304, %306 : vector<2x256xf32>
      %308 = vector.broadcast %83 : f32 to vector<2x256xf32>
      %309 = arith.mulf %308, %149 : vector<2x256xf32>
      %310 = arith.addf %307, %309 : vector<2x256xf32>
      %311 = vector.broadcast %84 : f32 to vector<2x256xf32>
      %312 = arith.mulf %311, %152 : vector<2x256xf32>
      %313 = arith.addf %310, %312 : vector<2x256xf32>
      %c208_i32 = arith.constant 208 : i32
      %314 = tpu.dynamic_rotate %313 by %c208_i32 dim 1 : vector<2x256xf32>, i32 -> vector<2x256xf32>
      %315 = vector.broadcast %35 : vector<1x256xf32> to vector<2x256xf32>
      %316 = arith.mulf %314, %315 : vector<2x256xf32>
      %317 = arith.addf %293, %316 : vector<2x256xf32>
      %c3_i32_39 = arith.constant 3 : i32
      %318 = tpu.dynamic_rotate %23 by %c3_i32_39 dim 1 : vector<2x256xf32>, i32 -> vector<2x256xf32>
      %319 = vector.broadcast %24 : vector<1x256xf32> to vector<2x256xf32>
      %320 = arith.mulf %318, %319 : vector<2x256xf32>
      %c2_i32_40 = arith.constant 2 : i32
      %321 = tpu.dynamic_rotate %23 by %c2_i32_40 dim 1 : vector<2x256xf32>, i32 -> vector<2x256xf32>
      %322 = vector.broadcast %25 : vector<1x256xf32> to vector<2x256xf32>
      %323 = arith.mulf %321, %322 : vector<2x256xf32>
      %c1_i32_41 = arith.constant 1 : i32
      %324 = tpu.dynamic_rotate %23 by %c1_i32_41 dim 1 : vector<2x256xf32>, i32 -> vector<2x256xf32>
      %325 = vector.broadcast %26 : vector<1x256xf32> to vector<2x256xf32>
      %326 = arith.mulf %324, %325 : vector<2x256xf32>
      %c255_i32_42 = arith.constant 255 : i32
      %327 = tpu.dynamic_rotate %23 by %c255_i32_42 dim 1 : vector<2x256xf32>, i32 -> vector<2x256xf32>
      %328 = vector.broadcast %27 : vector<1x256xf32> to vector<2x256xf32>
      %329 = arith.mulf %327, %328 : vector<2x256xf32>
      %c254_i32_43 = arith.constant 254 : i32
      %330 = tpu.dynamic_rotate %23 by %c254_i32_43 dim 1 : vector<2x256xf32>, i32 -> vector<2x256xf32>
      %331 = vector.broadcast %28 : vector<1x256xf32> to vector<2x256xf32>
      %332 = arith.mulf %330, %331 : vector<2x256xf32>
      %c253_i32_44 = arith.constant 253 : i32
      %333 = tpu.dynamic_rotate %23 by %c253_i32_44 dim 1 : vector<2x256xf32>, i32 -> vector<2x256xf32>
      %334 = vector.broadcast %29 : vector<1x256xf32> to vector<2x256xf32>
      %335 = arith.mulf %333, %334 : vector<2x256xf32>
      %336 = vector.broadcast %85 : f32 to vector<2x256xf32>
      %337 = arith.mulf %336, %320 : vector<2x256xf32>
      %338 = vector.broadcast %86 : f32 to vector<2x256xf32>
      %339 = arith.mulf %338, %323 : vector<2x256xf32>
      %340 = arith.addf %337, %339 : vector<2x256xf32>
      %341 = vector.broadcast %87 : f32 to vector<2x256xf32>
      %342 = arith.mulf %341, %326 : vector<2x256xf32>
      %343 = arith.addf %340, %342 : vector<2x256xf32>
      %344 = vector.broadcast %88 : f32 to vector<2x256xf32>
      %345 = arith.mulf %344, %23 : vector<2x256xf32>
      %346 = arith.addf %343, %345 : vector<2x256xf32>
      %347 = vector.broadcast %89 : f32 to vector<2x256xf32>
      %348 = arith.mulf %347, %329 : vector<2x256xf32>
      %349 = arith.addf %346, %348 : vector<2x256xf32>
      %350 = vector.broadcast %90 : f32 to vector<2x256xf32>
      %351 = arith.mulf %350, %332 : vector<2x256xf32>
      %352 = arith.addf %349, %351 : vector<2x256xf32>
      %353 = vector.broadcast %91 : f32 to vector<2x256xf32>
      %354 = arith.mulf %353, %335 : vector<2x256xf32>
      %355 = arith.addf %352, %354 : vector<2x256xf32>
      %c48_i32_45 = arith.constant 48 : i32
      %356 = tpu.dynamic_rotate %355 by %c48_i32_45 dim 1 : vector<2x256xf32>, i32 -> vector<2x256xf32>
      %357 = vector.broadcast %30 : vector<1x256xf32> to vector<2x256xf32>
      %358 = arith.mulf %356, %357 : vector<2x256xf32>
      %359 = arith.addf %317, %358 : vector<2x256xf32>
      %360 = vector.broadcast %92 : f32 to vector<2x256xf32>
      %361 = arith.mulf %360, %320 : vector<2x256xf32>
      %362 = vector.broadcast %93 : f32 to vector<2x256xf32>
      %363 = arith.mulf %362, %323 : vector<2x256xf32>
      %364 = arith.addf %361, %363 : vector<2x256xf32>
      %365 = vector.broadcast %94 : f32 to vector<2x256xf32>
      %366 = arith.mulf %365, %326 : vector<2x256xf32>
      %367 = arith.addf %364, %366 : vector<2x256xf32>
      %368 = vector.broadcast %95 : f32 to vector<2x256xf32>
      %369 = arith.mulf %368, %23 : vector<2x256xf32>
      %370 = arith.addf %367, %369 : vector<2x256xf32>
      %371 = vector.broadcast %96 : f32 to vector<2x256xf32>
      %372 = arith.mulf %371, %329 : vector<2x256xf32>
      %373 = arith.addf %370, %372 : vector<2x256xf32>
      %374 = vector.broadcast %97 : f32 to vector<2x256xf32>
      %375 = arith.mulf %374, %332 : vector<2x256xf32>
      %376 = arith.addf %373, %375 : vector<2x256xf32>
      %377 = vector.broadcast %98 : f32 to vector<2x256xf32>
      %378 = arith.mulf %377, %335 : vector<2x256xf32>
      %379 = arith.addf %376, %378 : vector<2x256xf32>
      %c32_i32_46 = arith.constant 32 : i32
      %380 = tpu.dynamic_rotate %379 by %c32_i32_46 dim 1 : vector<2x256xf32>, i32 -> vector<2x256xf32>
      %381 = vector.broadcast %31 : vector<1x256xf32> to vector<2x256xf32>
      %382 = arith.mulf %380, %381 : vector<2x256xf32>
      %383 = arith.addf %359, %382 : vector<2x256xf32>
      %384 = vector.broadcast %99 : f32 to vector<2x256xf32>
      %385 = arith.mulf %384, %320 : vector<2x256xf32>
      %386 = vector.broadcast %100 : f32 to vector<2x256xf32>
      %387 = arith.mulf %386, %323 : vector<2x256xf32>
      %388 = arith.addf %385, %387 : vector<2x256xf32>
      %389 = vector.broadcast %101 : f32 to vector<2x256xf32>
      %390 = arith.mulf %389, %326 : vector<2x256xf32>
      %391 = arith.addf %388, %390 : vector<2x256xf32>
      %392 = vector.broadcast %102 : f32 to vector<2x256xf32>
      %393 = arith.mulf %392, %23 : vector<2x256xf32>
      %394 = arith.addf %391, %393 : vector<2x256xf32>
      %395 = vector.broadcast %103 : f32 to vector<2x256xf32>
      %396 = arith.mulf %395, %329 : vector<2x256xf32>
      %397 = arith.addf %394, %396 : vector<2x256xf32>
      %398 = vector.broadcast %104 : f32 to vector<2x256xf32>
      %399 = arith.mulf %398, %332 : vector<2x256xf32>
      %400 = arith.addf %397, %399 : vector<2x256xf32>
      %401 = vector.broadcast %105 : f32 to vector<2x256xf32>
      %402 = arith.mulf %401, %335 : vector<2x256xf32>
      %403 = arith.addf %400, %402 : vector<2x256xf32>
      %c16_i32_47 = arith.constant 16 : i32
      %404 = tpu.dynamic_rotate %403 by %c16_i32_47 dim 1 : vector<2x256xf32>, i32 -> vector<2x256xf32>
      %405 = vector.broadcast %32 : vector<1x256xf32> to vector<2x256xf32>
      %406 = arith.mulf %404, %405 : vector<2x256xf32>
      %407 = arith.addf %383, %406 : vector<2x256xf32>
      %408 = vector.broadcast %106 : f32 to vector<2x256xf32>
      %409 = arith.mulf %408, %320 : vector<2x256xf32>
      %410 = vector.broadcast %107 : f32 to vector<2x256xf32>
      %411 = arith.mulf %410, %323 : vector<2x256xf32>
      %412 = arith.addf %409, %411 : vector<2x256xf32>
      %413 = vector.broadcast %108 : f32 to vector<2x256xf32>
      %414 = arith.mulf %413, %326 : vector<2x256xf32>
      %415 = arith.addf %412, %414 : vector<2x256xf32>
      %416 = vector.broadcast %109 : f32 to vector<2x256xf32>
      %417 = arith.mulf %416, %23 : vector<2x256xf32>
      %418 = arith.addf %415, %417 : vector<2x256xf32>
      %419 = vector.broadcast %110 : f32 to vector<2x256xf32>
      %420 = arith.mulf %419, %329 : vector<2x256xf32>
      %421 = arith.addf %418, %420 : vector<2x256xf32>
      %422 = vector.broadcast %111 : f32 to vector<2x256xf32>
      %423 = arith.mulf %422, %332 : vector<2x256xf32>
      %424 = arith.addf %421, %423 : vector<2x256xf32>
      %425 = vector.broadcast %112 : f32 to vector<2x256xf32>
      %426 = arith.mulf %425, %335 : vector<2x256xf32>
      %427 = arith.addf %424, %426 : vector<2x256xf32>
      %428 = arith.addf %407, %427 : vector<2x256xf32>
      %429 = vector.broadcast %113 : f32 to vector<2x256xf32>
      %430 = arith.mulf %429, %320 : vector<2x256xf32>
      %431 = vector.broadcast %114 : f32 to vector<2x256xf32>
      %432 = arith.mulf %431, %323 : vector<2x256xf32>
      %433 = arith.addf %430, %432 : vector<2x256xf32>
      %434 = vector.broadcast %115 : f32 to vector<2x256xf32>
      %435 = arith.mulf %434, %326 : vector<2x256xf32>
      %436 = arith.addf %433, %435 : vector<2x256xf32>
      %437 = vector.broadcast %116 : f32 to vector<2x256xf32>
      %438 = arith.mulf %437, %23 : vector<2x256xf32>
      %439 = arith.addf %436, %438 : vector<2x256xf32>
      %440 = vector.broadcast %117 : f32 to vector<2x256xf32>
      %441 = arith.mulf %440, %329 : vector<2x256xf32>
      %442 = arith.addf %439, %441 : vector<2x256xf32>
      %443 = vector.broadcast %118 : f32 to vector<2x256xf32>
      %444 = arith.mulf %443, %332 : vector<2x256xf32>
      %445 = arith.addf %442, %444 : vector<2x256xf32>
      %446 = vector.broadcast %119 : f32 to vector<2x256xf32>
      %447 = arith.mulf %446, %335 : vector<2x256xf32>
      %448 = arith.addf %445, %447 : vector<2x256xf32>
      %c240_i32_48 = arith.constant 240 : i32
      %449 = tpu.dynamic_rotate %448 by %c240_i32_48 dim 1 : vector<2x256xf32>, i32 -> vector<2x256xf32>
      %450 = vector.broadcast %33 : vector<1x256xf32> to vector<2x256xf32>
      %451 = arith.mulf %449, %450 : vector<2x256xf32>
      %452 = arith.addf %428, %451 : vector<2x256xf32>
      %453 = vector.broadcast %120 : f32 to vector<2x256xf32>
      %454 = arith.mulf %453, %320 : vector<2x256xf32>
      %455 = vector.broadcast %121 : f32 to vector<2x256xf32>
      %456 = arith.mulf %455, %323 : vector<2x256xf32>
      %457 = arith.addf %454, %456 : vector<2x256xf32>
      %458 = vector.broadcast %122 : f32 to vector<2x256xf32>
      %459 = arith.mulf %458, %326 : vector<2x256xf32>
      %460 = arith.addf %457, %459 : vector<2x256xf32>
      %461 = vector.broadcast %123 : f32 to vector<2x256xf32>
      %462 = arith.mulf %461, %23 : vector<2x256xf32>
      %463 = arith.addf %460, %462 : vector<2x256xf32>
      %464 = vector.broadcast %124 : f32 to vector<2x256xf32>
      %465 = arith.mulf %464, %329 : vector<2x256xf32>
      %466 = arith.addf %463, %465 : vector<2x256xf32>
      %467 = vector.broadcast %125 : f32 to vector<2x256xf32>
      %468 = arith.mulf %467, %332 : vector<2x256xf32>
      %469 = arith.addf %466, %468 : vector<2x256xf32>
      %470 = vector.broadcast %126 : f32 to vector<2x256xf32>
      %471 = arith.mulf %470, %335 : vector<2x256xf32>
      %472 = arith.addf %469, %471 : vector<2x256xf32>
      %c224_i32_49 = arith.constant 224 : i32
      %473 = tpu.dynamic_rotate %472 by %c224_i32_49 dim 1 : vector<2x256xf32>, i32 -> vector<2x256xf32>
      %474 = vector.broadcast %34 : vector<1x256xf32> to vector<2x256xf32>
      %475 = arith.mulf %473, %474 : vector<2x256xf32>
      %476 = arith.addf %452, %475 : vector<2x256xf32>
      %477 = vector.broadcast %127 : f32 to vector<2x256xf32>
      %478 = arith.mulf %477, %320 : vector<2x256xf32>
      %479 = vector.broadcast %128 : f32 to vector<2x256xf32>
      %480 = arith.mulf %479, %323 : vector<2x256xf32>
      %481 = arith.addf %478, %480 : vector<2x256xf32>
      %482 = vector.broadcast %129 : f32 to vector<2x256xf32>
      %483 = arith.mulf %482, %326 : vector<2x256xf32>
      %484 = arith.addf %481, %483 : vector<2x256xf32>
      %485 = vector.broadcast %130 : f32 to vector<2x256xf32>
      %486 = arith.mulf %485, %23 : vector<2x256xf32>
      %487 = arith.addf %484, %486 : vector<2x256xf32>
      %488 = vector.broadcast %131 : f32 to vector<2x256xf32>
      %489 = arith.mulf %488, %329 : vector<2x256xf32>
      %490 = arith.addf %487, %489 : vector<2x256xf32>
      %491 = vector.broadcast %132 : f32 to vector<2x256xf32>
      %492 = arith.mulf %491, %332 : vector<2x256xf32>
      %493 = arith.addf %490, %492 : vector<2x256xf32>
      %494 = vector.broadcast %133 : f32 to vector<2x256xf32>
      %495 = arith.mulf %494, %335 : vector<2x256xf32>
      %496 = arith.addf %493, %495 : vector<2x256xf32>
      %c208_i32_50 = arith.constant 208 : i32
      %497 = tpu.dynamic_rotate %496 by %c208_i32_50 dim 1 : vector<2x256xf32>, i32 -> vector<2x256xf32>
      %498 = vector.broadcast %35 : vector<1x256xf32> to vector<2x256xf32>
      %499 = arith.mulf %497, %498 : vector<2x256xf32>
      %500 = arith.addf %476, %499 : vector<2x256xf32>
      %501 = arith.negf %500 : vector<2x256xf32>
      %502 = math.exp %501 : vector<2x256xf32>
      %cst_51 = arith.constant 1.000000e+00 : f32
      %503 = vector.broadcast %cst_51 : f32 to vector<2x256xf32>
      %504 = arith.addf %503, %502 : vector<2x256xf32>
      %505 = arith.divf %503, %504 : vector<2x256xf32>
      %c0_52 = arith.constant 0 : index
      %c0_53 = arith.constant 0 : index
      %506 = vector.load %arg5[%c0_52, %c0_53] : memref<2x256xf32, #tpu.memory_space<vmem>>, vector<2x256xf32>
      tpu.vector_store %arg5[%c0_52, %c0_53], %505 {strides = array<i32>} : memref<2x256xf32, #tpu.memory_space<vmem>>, vector<2x256xf32>,
    } else {
    }
    return
  }
  func.func @transform_0(%arg0: i32, %arg1: i32) -> i32 {
    %c0_i32 = arith.constant 0 : i32
    %c0_i32_0 = arith.constant 0 : i32
    return %c0_i32 : i32
  }
  func.func @transform_1(%arg0: i32, %arg1: i32) -> (i32, i32) {
    %c0_i32 = arith.constant 0 : i32
    %c0_i32_0 = arith.constant 0 : i32
    %c0_i32_1 = arith.constant 0 : i32
    return %c0_i32, %c0_i32_0 : i32, i32
  }
  func.func @transform_2(%arg0: i32, %arg1: i32) -> (i32, i32, i32) {
    %c0_i32 = arith.constant 0 : i32
    %c0_i32_0 = arith.constant 0 : i32
    return %arg0, %arg1, %c0_i32 : i32, i32, i32
  }
  func.func @transform_3(%arg0: i32, %arg1: i32) -> (i32, i32) {
    %c0_i32 = arith.constant 0 : i32
    %c0_i32_0 = arith.constant 0 : i32
    return %arg0, %c0_i32 : i32, i32
  }
}

</mosaic_0001>

<llo_original>
// kernel: tpu_custom_call.1
$region0: #{tpu_custom_call.1}
  #allocation0 [shape = 'u32[]', space=smem, size = 0x4, offset = 0x4, fixed_abs, tag = 'smem constant byte address 0x4 - core index']
  #allocation1 [shape = 'u32[144,128]{1,0:T(1,128)}', space=vmem, size = 0x12000, scoped, tag = 'internal scratch']
  #allocation2 [shape = 'f32[2,256]{1,0:T(2,128)}', space=vmem, size = 0x800, scoped, tag = 'scratch operand']
  #allocation3 [shape = 'f32[2,256]{1,0:T(2,128)}', space=vmem, size = 0x800, scoped, tag = 'scratch operand']
  %s0 = inlined_call_operand.hbm [shape: f32[98], index: 0, kind: input, shape index: {}]
  %s1 = inlined_call_operand.hbm [shape: f32[14,256], index: 1, kind: input, shape index: {}]
  %s2 = inlined_call_operand.hbm [shape: f32[2,8,256], index: 2, kind: input, shape index: {}]
  %s3 = inlined_call_operand.hbm [shape: f32[2,256], index: 3, kind: output, shape index: {}]
  %s4 = sld [smem:[#allocation0]]
  $region46: #{tpu_custom_call.1} parent=0
    _
  %s6 = ssub.s32 1, %s4
  %s7 = scalar_select 0, %s6, %s4
  $region1: #{tpu_custom_call.1} parent=0
    #allocation4 [shape = 'u8[512]{0}', space=smem, size = 0x200, scoped, tag = 'input window, operand 0, single buffered']
    #allocation5 [shape = 's32[1]{0}', space=sflag, size = 0x4, scoped, tag = 'scoped memory for tpu_custom_call.1']
    #allocation6 [shape = 's32[1]{0}', space=sflag, size = 0x4, scoped, tag = 'scoped memory for tpu_custom_call.1']
    #allocation7 [shape = 's32[1]{0}', space=sflag, size = 0x4, scoped, tag = 'scoped memory for tpu_custom_call.1']
    #allocation8 [shape = 'u8[16384]{0}', space=vmem, size = 0x4000, scoped, tag = 'input window, operand 1, single buffered']
    #allocation9 [shape = 'u8[16384]{0}', space=vmem, size = 0x4000, scoped, tag = 'input window, operand 2, single buffered']
    #allocation10 [shape = 's32[1]{0}', space=sflag, size = 0x4, scoped, tag = 'scoped memory for tpu_custom_call.1']
    #allocation11 [shape = 'u8[2048]{0}', space=vmem, size = 0x800, scoped, tag = 'output window, operand 0, single buffered']
    %8 = vsyncpa [#allocation7], 0
    %9 = vsyncpa [#allocation5], 0
    %10 = vsyncpa [#allocation10], 0
    %11 = vsyncpa [#allocation6], 0
    // Predicated region
    $region2: #{tpu_custom_call.1} parent=1 // pred_check
      _
    $region3: #{tpu_custom_call.1} parent=1 // pred_check_branch
      %13 = sbr.rel (0) target = $region5
    $region4: #{tpu_custom_call.1} parent=1 // pred_region
      %s15 = ssub.s32 16, 16
      %16 = vsyncadd [#allocation7], %s15
      %19 = dma.hbm_to_smem %s0, 16, [#allocation4], [#allocation7]
    $region5: #{tpu_custom_call.1} parent=1 // pred_fallthru
      _
    // Predicated region
    $region6: #{tpu_custom_call.1} parent=1 // pred_check
      _
    $region7: #{tpu_custom_call.1} parent=1 // pred_check_branch
      %21 = sbr.rel (0) target = $region9
    $region8: #{tpu_custom_call.1} parent=1 // pred_region
      %s23 = ssub.s32 512, 512
      %24 = vsyncadd [#allocation5], %s23
      %s25 = sshll.u32 [#allocation8], 4
      %s26 = int_to_ptr.vmem [resolvable:$true] %s25
      %31 = dma.hbm_to_vmem [thread:$0]  %s1, 512, %s26, [#allocation5], 256, 256, 16
    $region9: #{tpu_custom_call.1} parent=1 // pred_fallthru
      _
    // Predicated region
    $region10: #{tpu_custom_call.1} parent=1 // pred_check
      _
    $region11: #{tpu_custom_call.1} parent=1 // pred_check_branch
      %33 = sbr.rel (0) target = $region13
    $region12: #{tpu_custom_call.1} parent=1 // pred_region
      %s35 = ssub.s32 512, 512
      %36 = vsyncadd [#allocation10], %s35
      %s37 = sshll.u32 [#allocation9], 4
      %s38 = int_to_ptr.vmem [resolvable:$true] %s37
      %43 = dma.hbm_to_vmem [thread:$0]  %s2, 512, %s38, [#allocation10], 256, 256, 16
    $region13: #{tpu_custom_call.1} parent=1 // pred_fallthru
      _
    // Predicated region
    $region14: #{tpu_custom_call.1} parent=1 // pred_check
      _
    $region15: #{tpu_custom_call.1} parent=1 // pred_check_branch
      %45 = sbr.rel (0) target = $region17
    $region16: #{tpu_custom_call.1} parent=1 // pred_region
      %46 = dma.done [#allocation7], 16
    $region17: #{tpu_custom_call.1} parent=1 // pred_fallthru
      _
    // Predicated region
    $region18: #{tpu_custom_call.1} parent=1 // pred_check
      _
    $region19: #{tpu_custom_call.1} parent=1 // pred_check_branch
      %48 = sbr.rel (0) target = $region21
    $region20: #{tpu_custom_call.1} parent=1 // pred_region
      %49 = dma.done [#allocation5], 512
    $region21: #{tpu_custom_call.1} parent=1 // pred_fallthru
      _
    // Predicated region
    $region22: #{tpu_custom_call.1} parent=1 // pred_check
      _
    $region23: #{tpu_custom_call.1} parent=1 // pred_check_branch
      %51 = sbr.rel (0) target = $region25
    $region24: #{tpu_custom_call.1} parent=1 // pred_region
      %52 = dma.done [#allocation10], 512
    $region25: #{tpu_custom_call.1} parent=1 // pred_fallthru
      _
    %53 = sfence
    %v54 = vld [vmem:[#allocation9] sm:$0xff]
    %v55 = vld [vmem:[#allocation9 + $0x8] sm:$0xff]
    %v56 = vld [vmem:[#allocation9 + $0x10] sm:$0xff]
    %v57 = vld [vmem:[#allocation9 + $0x18] sm:$0xff]
    %v58 = vrot.slane %v54, 4
    %v59 = vadd.f32 %v54, %v58
    %v60 = vrot.slane %v59, 2
    %v61 = vadd.f32 %v59, %v60
    %v62 = vrot.slane %v61, 1
    %v63 = vadd.f32 %v61, %v62
    %v64 = vrot.slane %v55, 4
    %v65 = vadd.f32 %v55, %v64
    %v66 = vrot.slane %v65, 2
    %v67 = vadd.f32 %v65, %v66
    %v68 = vrot.slane %v67, 1
    %v69 = vadd.f32 %v67, %v68
    %v70 = vrot.slane %v56, 4
    %v71 = vadd.f32 %v56, %v70
    %v72 = vrot.slane %v71, 2
    %v73 = vadd.f32 %v71, %v72
    %v74 = vrot.slane %v73, 1
    %v75 = vadd.f32 %v73, %v74
    %v76 = vrot.slane %v57, 4
    %v77 = vadd.f32 %v57, %v76
    %v78 = vrot.slane %v77, 2
    %v79 = vadd.f32 %v77, %v78
    %v80 = vrot.slane %v79, 1
    %v81 = vadd.f32 %v79, %v80
    %v82 = vlaneseq
    %v83 = vshrl.u32 %v82, 7
    %s84 = smul.u32 0, 8
    %s85 = ssub.s32 4, %s84
    %v86 = vstv %s85
    %vm87 = vcmp.lt.s32.totalorder %v83, %v86
    %v88 = vsel %vm87, 1, 0
    %vm89 = vcmp.eq.s32.totalorder %v88, 1
    %v90 = vsel %vm89, %v54, -3.4028235e+38
    %v91 = vsel %vm89, %v55, -3.4028235e+38
    %v92 = vsel %vm89, %v56, -3.4028235e+38
    %v93 = vsel %vm89, %v57, -3.4028235e+38
    %v94 = vrot.slane %v90, 4
    %v95 = vmax.f32 %v90, %v94
    %v96 = vrot.slane %v95, 2
    %v97 = vmax.f32 %v95, %v96
    %v98 = vrot.slane %v97, 1
    %v99 = vmax.f32 %v97, %v98
    %v100 = vrot.slane %v91, 4
    %v101 = vmax.f32 %v91, %v100
    %v102 = vrot.slane %v101, 2
    %v103 = vmax.f32 %v101, %v102
    %v104 = vrot.slane %v103, 1
    %v105 = vmax.f32 %v103, %v104
    %v106 = vrot.slane %v92, 4
    %v107 = vmax.f32 %v92, %v106
    %v108 = vrot.slane %v107, 2
    %v109 = vmax.f32 %v107, %v108
    %v110 = vrot.slane %v109, 1
    %v111 = vmax.f32 %v109, %v110
    %v112 = vrot.slane %v93, 4
    %v113 = vmax.f32 %v93, %v112
    %v114 = vrot.slane %v113, 2
    %v115 = vmax.f32 %v113, %v114
    %v116 = vrot.slane %v115, 1
    %v117 = vmax.f32 %v115, %v116
    %p118 = scmp.eq.s32.totalorder 0, 0
    // Predicated region
    $region26: #{tpu_custom_call.1} parent=1 // pred_check
      %p119 = pneg %p118
    $region27: #{tpu_custom_call.1} parent=1 // pred_check_branch
      %121 = sbr.rel (%p119) target = $region29
    $region28: #{tpu_custom_call.1} parent=1 // pred_region
      %v126 = vcombine.low %v63, %v69
      %v128 = vunpack.c.l.s4 1983009808
      %v129 = vunpack.c.0.s8 %v128
      %v130 = vlaneseq
      %v131 = vshrl.u32 %v130, 7
      %v132 = vsub.s32 %v129, %v131
      %v133 = vrot.slane %v126, %v132
      %v134 = vcombine.low %v75, %v81
      %v136 = vunpack.c.l.s4 1983009808
      %v137 = vunpack.c.0.s8 %v136
      %v138 = vlaneseq
      %v139 = vshrl.u32 %v138, 7
      %v140 = vsub.s32 %v137, %v139
      %v141 = vrot.slane %v134, %v140
      %vm142 = vcmask 1044484
      %v143 = vsel %vm142, %v133, %v133
      %vm144 = vcmask 1046534
      %v145 = vsel %vm144, %v133, %v143
      %v146 = vrot.slane %v141, 7
      %vm147 = vcmask 1041409
      %v148 = vsel %vm147, %v146, %v145
      %vm149 = vcmask 1043459
      %v150 = vsel %vm149, %v146, %v148
      %vm151 = vcmask 1045509
      %v152 = vsel %vm151, %v146, %v150
      %vm153 = vcmask 1047559
      %v154 = vsel %vm153, %v146, %v152
      %156 = vst [vmem:[#allocation2] sm:$0xf] %v154
      %v161 = vcombine.low %v99, %v105
      %v163 = vunpack.c.l.s4 1983009808
      %v164 = vunpack.c.0.s8 %v163
      %v165 = vlaneseq
      %v166 = vshrl.u32 %v165, 7
      %v167 = vsub.s32 %v164, %v166
      %v168 = vrot.slane %v161, %v167
      %v169 = vcombine.low %v111, %v117
      %v171 = vunpack.c.l.s4 1983009808
      %v172 = vunpack.c.0.s8 %v171
      %v173 = vlaneseq
      %v174 = vshrl.u32 %v173, 7
      %v175 = vsub.s32 %v172, %v174
      %v176 = vrot.slane %v169, %v175
      %v177 = vsel %vm142, %v168, %v168
      %v178 = vsel %vm144, %v168, %v177
      %v179 = vrot.slane %v176, 7
      %v180 = vsel %vm147, %v179, %v178
      %v181 = vsel %vm149, %v179, %v180
      %v182 = vsel %vm151, %v179, %v181
      %v183 = vsel %vm153, %v179, %v182
      %185 = vst [vmem:[#allocation3] sm:$0xf] %v183
    $region29: #{tpu_custom_call.1} parent=1 // pred_fallthru
      _
    %p186 = scmp.gt.s32.totalorder 0, 0
    // Predicated region
    $region30: #{tpu_custom_call.1} parent=1 // pred_check
      %p187 = pneg %p186
    $region31: #{tpu_custom_call.1} parent=1 // pred_check_branch
      %189 = sbr.rel (%p187) target = $region33
    $region32: #{tpu_custom_call.1} parent=1 // pred_region
      %v190 = vld [vmem:[#allocation2] sm:$0xf]
      %v195 = vcombine.low %v63, %v69
      %v197 = vunpack.c.l.s4 1983009808
      %v198 = vunpack.c.0.s8 %v197
      %v199 = vlaneseq
      %v200 = vshrl.u32 %v199, 7
      %v201 = vsub.s32 %v198, %v200
      %v202 = vrot.slane %v195, %v201
      %v203 = vcombine.low %v75, %v81
      %v205 = vunpack.c.l.s4 1983009808
      %v206 = vunpack.c.0.s8 %v205
      %v207 = vlaneseq
      %v208 = vshrl.u32 %v207, 7
      %v209 = vsub.s32 %v206, %v208
      %v210 = vrot.slane %v203, %v209
      %vm211 = vcmask 1044484
      %v212 = vsel %vm211, %v202, %v202
      %vm213 = vcmask 1046534
      %v214 = vsel %vm213, %v202, %v212
      %v215 = vrot.slane %v210, 7
      %vm216 = vcmask 1041409
      %v217 = vsel %vm216, %v215, %v214
      %vm218 = vcmask 1043459
      %v219 = vsel %vm218, %v215, %v217
      %vm220 = vcmask 1045509
      %v221 = vsel %vm220, %v215, %v219
      %vm222 = vcmask 1047559
      %v223 = vsel %vm222, %v215, %v221
      %v225 = vadd.f32 %v190, %v223
      %226 = vst [vmem:[#allocation2] sm:$0xf] %v225
      %v227 = vld [vmem:[#allocation3] sm:$0xf]
      %v232 = vcombine.low %v99, %v105
      %v234 = vunpack.c.l.s4 1983009808
      %v235 = vunpack.c.0.s8 %v234
      %v236 = vlaneseq
      %v237 = vshrl.u32 %v236, 7
      %v238 = vsub.s32 %v235, %v237
      %v239 = vrot.slane %v232, %v238
      %v240 = vcombine.low %v111, %v117
      %v242 = vunpack.c.l.s4 1983009808
      %v243 = vunpack.c.0.s8 %v242
      %v244 = vlaneseq
      %v245 = vshrl.u32 %v244, 7
      %v246 = vsub.s32 %v243, %v245
      %v247 = vrot.slane %v240, %v246
      %v248 = vsel %vm211, %v239, %v239
      %v249 = vsel %vm213, %v239, %v248
      %v250 = vrot.slane %v247, 7
      %v251 = vsel %vm216, %v250, %v249
      %v252 = vsel %vm218, %v250, %v251
      %v253 = vsel %vm220, %v250, %v252
      %v254 = vsel %vm222, %v250, %v253
      %v256 = vmax.f32 %v227, %v254
      %257 = vst [vmem:[#allocation3] sm:$0xf] %v256
    $region33: #{tpu_custom_call.1} parent=1 // pred_fallthru
      _
    // Predicated region
    $region34: #{tpu_custom_call.1} parent=1 // pred_check
      %p258 = pneg %p118
    $region35: #{tpu_custom_call.1} parent=1 // pred_check_branch
      %260 = sbr.rel (%p258) target = $region37
    $region36: #{tpu_custom_call.1} parent=1 // pred_region
      %v261 = vld [vmem:[#allocation2] sm:$0xf]
      %v262 = vld [vmem:[#allocation3] sm:$0xf]
      %v263 = vld [vmem:[#allocation8] ss:$8 sm:$0x3]
      %s264 = scalar_lea.vmem [#allocation8], 1
      %v265 = vld [vmem:[%s264] ss:$8 sm:$0x3]
      %s266 = scalar_lea.vmem [#allocation8], 2
      %v267 = vld [vmem:[%s266] ss:$8 sm:$0x3]
      %s268 = scalar_lea.vmem [#allocation8], 4
      %v269 = vld [vmem:[%s268] ss:$8 sm:$0x3]
      %s270 = scalar_lea.vmem [#allocation8], 5
      %v271 = vld [vmem:[%s270] ss:$8 sm:$0x3]
      %s272 = scalar_lea.vmem [#allocation8], 6
      %v273 = vld [vmem:[%s272] ss:$8 sm:$0x3]
      %s274 = scalar_lea.vmem [#allocation8], 7
      %v275 = vld [vmem:[%s274] ss:$8 sm:$0x3]
      %s276 = scalar_lea.vmem [#allocation8], 16
      %v277 = vld [vmem:[%s276] ss:$8 sm:$0x3]
      %s278 = scalar_lea.vmem [#allocation8], 17
      %v279 = vld [vmem:[%s278] ss:$8 sm:$0x3]
      %s280 = scalar_lea.vmem [#allocation8], 19
      %v281 = vld [vmem:[%s280] ss:$8 sm:$0x3]
      %s282 = scalar_lea.vmem [#allocation8], 20
      %v283 = vld [vmem:[%s282] ss:$8 sm:$0x3]
      %s284 = scalar_lea.vmem [#allocation8], 21
      %v285 = vld [vmem:[%s284] ss:$8 sm:$0x3]
      %s286 = sld [smem:[#allocation4]]
      %s287 = sld [smem:[#allocation4 + $0x1]]
      %s288 = sld [smem:[#allocation4 + $0x2]]
      %s289 = sld [smem:[#allocation4 + $0x3]]
      %s290 = sld [smem:[#allocation4 + $0x4]]
      %s291 = sld [smem:[#allocation4 + $0x5]]
      %s292 = sld [smem:[#allocation4 + $0x6]]
      %s293 = sld [smem:[#allocation4 + $0x7]]
      %s294 = sld [smem:[#allocation4 + $0x8]]
      %s295 = sld [smem:[#allocation4 + $0x9]]
      %s296 = sld [smem:[#allocation4 + $0xa]]
      %s297 = sld [smem:[#allocation4 + $0xb]]
      %s298 = sld [smem:[#allocation4 + $0xc]]
      %s299 = sld [smem:[#allocation4 + $0xd]]
      %s300 = sld [smem:[#allocation4 + $0xe]]
      %s301 = sld [smem:[#allocation4 + $0xf]]
      %s302 = sld [smem:[#allocation4 + $0x10]]
      %s303 = sld [smem:[#allocation4 + $0x11]]
      %s304 = sld [smem:[#allocation4 + $0x12]]
      %s305 = sld [smem:[#allocation4 + $0x13]]
      %s306 = sld [smem:[#allocation4 + $0x14]]
      %s307 = sld [smem:[#allocation4 + $0x15]]
      %s308 = sld [smem:[#allocation4 + $0x16]]
      %s309 = sld [smem:[#allocation4 + $0x17]]
      %s310 = sld [smem:[#allocation4 + $0x18]]
      %s311 = sld [smem:[#allocation4 + $0x19]]
      %s312 = sld [smem:[#allocation4 + $0x1a]]
      %s313 = sld [smem:[#allocation4 + $0x1b]]
      %s314 = sld [smem:[#allocation4 + $0x1c]]
      %s315 = sld [smem:[#allocation4 + $0x1d]]
      %s316 = sld [smem:[#allocation4 + $0x1e]]
      %s317 = sld [smem:[#allocation4 + $0x1f]]
      %s318 = sld [smem:[#allocation4 + $0x20]]
      %s319 = sld [smem:[#allocation4 + $0x21]]
      %s320 = sld [smem:[#allocation4 + $0x22]]
      %s321 = sld [smem:[#allocation4 + $0x23]]
      %s322 = sld [smem:[#allocation4 + $0x24]]
      %s323 = sld [smem:[#allocation4 + $0x25]]
      %s324 = sld [smem:[#allocation4 + $0x26]]
      %s325 = sld [smem:[#allocation4 + $0x27]]
      %s326 = sld [smem:[#allocation4 + $0x28]]
      %s327 = sld [smem:[#allocation4 + $0x29]]
      %s328 = sld [smem:[#allocation4 + $0x2a]]
      %s329 = sld [smem:[#allocation4 + $0x2b]]
      %s330 = sld [smem:[#allocation4 + $0x2c]]
      %s331 = sld [smem:[#allocation4 + $0x2d]]
      %s332 = sld [smem:[#allocation4 + $0x2e]]
      %s333 = sld [smem:[#allocation4 + $0x2f]]
      %s334 = sld [smem:[#allocation4 + $0x30]]
      %s335 = sld [smem:[#allocation4 + $0x31]]
      %s336 = sld [smem:[#allocation4 + $0x32]]
      %s337 = sld [smem:[#allocation4 + $0x33]]
      %s338 = sld [smem:[#allocation4 + $0x34]]
      %s339 = sld [smem:[#allocation4 + $0x35]]
      %s340 = sld [smem:[#allocation4 + $0x36]]
      %s341 = sld [smem:[#allocation4 + $0x37]]
      %s342 = sld [smem:[#allocation4 + $0x38]]
      %s343 = sld [smem:[#allocation4 + $0x39]]
      %s344 = sld [smem:[#allocation4 + $0x3a]]
      %s345 = sld [smem:[#allocation4 + $0x3b]]
      %s346 = sld [smem:[#allocation4 + $0x3c]]
      %s347 = sld [smem:[#allocation4 + $0x3d]]
      %s348 = sld [smem:[#allocation4 + $0x3e]]
      %s349 = sld [smem:[#allocation4 + $0x3f]]
      %s350 = sld [smem:[#allocation4 + $0x40]]
      %s351 = sld [smem:[#allocation4 + $0x41]]
      %s352 = sld [smem:[#allocation4 + $0x42]]
      %s353 = sld [smem:[#allocation4 + $0x43]]
      %s354 = sld [smem:[#allocation4 + $0x44]]
      %s355 = sld [smem:[#allocation4 + $0x45]]
      %s356 = sld [smem:[#allocation4 + $0x46]]
      %s357 = sld [smem:[#allocation4 + $0x47]]
      %s358 = sld [smem:[#allocation4 + $0x48]]
      %s359 = sld [smem:[#allocation4 + $0x49]]
      %s360 = sld [smem:[#allocation4 + $0x4a]]
      %s361 = sld [smem:[#allocation4 + $0x4b]]
      %s362 = sld [smem:[#allocation4 + $0x4c]]
      %s363 = sld [smem:[#allocation4 + $0x4d]]
      %s364 = sld [smem:[#allocation4 + $0x4e]]
      %s365 = sld [smem:[#allocation4 + $0x4f]]
      %s366 = sld [smem:[#allocation4 + $0x50]]
      %s367 = sld [smem:[#allocation4 + $0x51]]
      %s368 = sld [smem:[#allocation4 + $0x52]]
      %s369 = sld [smem:[#allocation4 + $0x53]]
      %s370 = sld [smem:[#allocation4 + $0x54]]
      %s371 = sld [smem:[#allocation4 + $0x55]]
      %s372 = sld [smem:[#allocation4 + $0x56]]
      %s373 = sld [smem:[#allocation4 + $0x57]]
      %s374 = sld [smem:[#allocation4 + $0x58]]
      %s375 = sld [smem:[#allocation4 + $0x59]]
      %s376 = sld [smem:[#allocation4 + $0x5a]]
      %s377 = sld [smem:[#allocation4 + $0x5b]]
      %s378 = sld [smem:[#allocation4 + $0x5c]]
      %s379 = sld [smem:[#allocation4 + $0x5d]]
      %s380 = sld [smem:[#allocation4 + $0x5e]]
      %s381 = sld [smem:[#allocation4 + $0x5f]]
      %s382 = sld [smem:[#allocation4 + $0x60]]
      %s383 = sld [smem:[#allocation4 + $0x61]]
      %v386 = vunpack.c.l.s4 1983009808
      %v387 = vunpack.c.0.s8 %v386
      %v388 = vlaneseq
      %v389 = vshrl.u32 %v388, 7
      %v390 = vsub.s32 %v387, %v389
      %v391 = vrot.slane %v261, %v390
      %v392 = vcombine.high %v391, %v391
      %395 = vrot.lane.b32.xlu0 %v391, 3
      %v396 = vpop.permute.xlu0 %395
      %397 = vrot.lane.b32.xlu0 %v392, 3
      %v398 = vpop.permute.xlu0 %397
      %v399 = vlaneseq
      %v400 = vand.u32 %v399, 127
      %vm401 = vcmp.lt.s32.totalorder %v400, 3
      %v402 = vsel %vm401, %v396, %v398
      %v403 = vsel %vm401, %v398, %v396
      %v405 = vlaneseq
      %v406 = vshrl.u32 %v405, 7
      %v407 = vsub.s32 0, %v406
      %v408 = vrot.slane %v263, %v407
      %v409 = vlaneseq
      %v410 = vshrl.u32 %v409, 7
      %v411 = vsub.s32 1, %v410
      %v412 = vrot.slane %v263, %v411
      %v415 = vmul.f32 %v403, %v408
      %v416 = vmul.f32 %v402, %v412
      %417 = vrot.lane.b32.xlu0 %v391, 2
      %v418 = vpop.permute.xlu0 %417
      %419 = vrot.lane.b32.xlu0 %v392, 2
      %v420 = vpop.permute.xlu0 %419
      %vm421 = vcmp.lt.s32.totalorder %v400, 2
      %v422 = vsel %vm421, %v418, %v420
      %v423 = vsel %vm421, %v420, %v418
      %v425 = vlaneseq
      %v426 = vshrl.u32 %v425, 7
      %v427 = vsub.s32 0, %v426
      %v428 = vrot.slane %v265, %v427
      %v429 = vlaneseq
      %v430 = vshrl.u32 %v429, 7
      %v431 = vsub.s32 1, %v430
      %v432 = vrot.slane %v265, %v431
      %v435 = vmul.f32 %v423, %v428
      %v436 = vmul.f32 %v422, %v432
      %437 = vrot.lane.b32.xlu0 %v391, 1
      %v438 = vpop.permute.xlu0 %437
      %439 = vrot.lane.b32.xlu0 %v392, 1
      %v440 = vpop.permute.xlu0 %439
      %vm441 = vcmp.lt.s32.totalorder %v400, 1
      %v442 = vsel %vm441, %v438, %v440
      %v443 = vsel %vm441, %v440, %v438
      %v445 = vlaneseq
      %v446 = vshrl.u32 %v445, 7
      %v447 = vsub.s32 0, %v446
      %v448 = vrot.slane %v267, %v447
      %v449 = vlaneseq
      %v450 = vshrl.u32 %v449, 7
      %v451 = vsub.s32 1, %v450
      %v452 = vrot.slane %v267, %v451
      %v455 = vmul.f32 %v443, %v448
      %v456 = vmul.f32 %v442, %v452
      %457 = vrot.lane.b32.xlu0 %v391, 127
      %v458 = vpop.permute.xlu0 %457
      %459 = vrot.lane.b32.xlu0 %v392, 127
      %v460 = vpop.permute.xlu0 %459
      %vm461 = vcmp.lt.s32.totalorder %v400, 127
      %v462 = vsel %vm461, %v458, %v460
      %v463 = vsel %vm461, %v460, %v458
      %v465 = vlaneseq
      %v466 = vshrl.u32 %v465, 7
      %v467 = vsub.s32 0, %v466
      %v468 = vrot.slane %v269, %v467
      %v469 = vlaneseq
      %v470 = vshrl.u32 %v469, 7
      %v471 = vsub.s32 1, %v470
      %v472 = vrot.slane %v269, %v471
      %v475 = vmul.f32 %v462, %v468
      %v476 = vmul.f32 %v463, %v472
      %477 = vrot.lane.b32.xlu0 %v391, 126
      %v478 = vpop.permute.xlu0 %477
      %479 = vrot.lane.b32.xlu0 %v392, 126
      %v480 = vpop.permute.xlu0 %479
      %vm481 = vcmp.lt.s32.totalorder %v400, 126
      %v482 = vsel %vm481, %v478, %v480
      %v483 = vsel %vm481, %v480, %v478
      %v485 = vlaneseq
      %v486 = vshrl.u32 %v485, 7
      %v487 = vsub.s32 0, %v486
      %v488 = vrot.slane %v271, %v487
      %v489 = vlaneseq
      %v490 = vshrl.u32 %v489, 7
      %v491 = vsub.s32 1, %v490
      %v492 = vrot.slane %v271, %v491
      %v495 = vmul.f32 %v482, %v488
      %v496 = vmul.f32 %v483, %v492
      %497 = vrot.lane.b32.xlu0 %v391, 125
      %v498 = vpop.permute.xlu0 %497
      %499 = vrot.lane.b32.xlu0 %v392, 125
      %v500 = vpop.permute.xlu0 %499
      %vm501 = vcmp.lt.s32.totalorder %v400, 125
      %v502 = vsel %vm501, %v498, %v500
      %v503 = vsel %vm501, %v500, %v498
      %v505 = vlaneseq
      %v506 = vshrl.u32 %v505, 7
      %v507 = vsub.s32 0, %v506
      %v508 = vrot.slane %v273, %v507
      %v509 = vlaneseq
      %v510 = vshrl.u32 %v509, 7
      %v511 = vsub.s32 1, %v510
      %v512 = vrot.slane %v273, %v511
      %v515 = vmul.f32 %v502, %v508
      %v516 = vmul.f32 %v503, %v512
      %v517 = vstv %s286
      %v518 = vmul.f32 %v517, %v415
      %v519 = vmul.f32 %v517, %v416
      %v520 = vstv %s287
      %v521 = vmul.f32 %v520, %v435
      %v522 = vmul.f32 %v520, %v436
      %v523 = vadd.f32 %v518, %v521
      %v524 = vadd.f32 %v519, %v522
      %v525 = vstv %s288
      %v526 = vmul.f32 %v525, %v455
      %v527 = vmul.f32 %v525, %v456
      %v528 = vadd.f32 %v523, %v526
      %v529 = vadd.f32 %v524, %v527
      %v530 = vstv %s289
      %v531 = vmul.f32 %v530, %v261
      %v534 = vunpack.c.l.s4 1983009808
      %v535 = vunpack.c.0.s8 %v534
      %v536 = vlaneseq
      %v537 = vshrl.u32 %v536, 7
      %v538 = vsub.s32 %v535, %v537
      %v539 = vrot.slane %v531, %v538
      %v540 = vcombine.high %v539, %v539
      %v543 = vadd.f32 %v528, %v539
      %v544 = vadd.f32 %v529, %v540
      %v545 = vstv %s290
      %v546 = vmul.f32 %v545, %v475
      %v547 = vmul.f32 %v545, %v476
      %v548 = vadd.f32 %v543, %v546
      %v549 = vadd.f32 %v544, %v547
      %v550 = vstv %s291
      %v551 = vmul.f32 %v550, %v495
      %v552 = vmul.f32 %v550, %v496
      %v553 = vadd.f32 %v548, %v551
      %v554 = vadd.f32 %v549, %v552
      %v555 = vstv %s292
      %v556 = vmul.f32 %v555, %v515
      %v557 = vmul.f32 %v555, %v516
      %v558 = vadd.f32 %v553, %v556
      %v559 = vadd.f32 %v554, %v557
      %560 = vrot.lane.b32.xlu0 %v558, 48
      %v561 = vpop.permute.xlu0 %560
      %562 = vrot.lane.b32.xlu0 %v559, 48
      %v563 = vpop.permute.xlu0 %562
      %vm564 = vcmp.lt.s32.totalorder %v400, 48
      %v565 = vsel %vm564, %v561, %v563
      %v566 = vsel %vm564, %v563, %v561
      %v568 = vlaneseq
      %v569 = vshrl.u32 %v568, 7
      %v570 = vsub.s32 0, %v569
      %v571 = vrot.slane %v275, %v570
      %v572 = vlaneseq
      %v573 = vshrl.u32 %v572, 7
      %v574 = vsub.s32 1, %v573
      %v575 = vrot.slane %v275, %v574
      %v578 = vmul.f32 %v566, %v571
      %v579 = vmul.f32 %v565, %v575
      %v580 = vadd.f32 %v578, 0.0
      %v581 = vadd.f32 %v579, 0.0
      %v582 = vstv %s293
      %v583 = vmul.f32 %v582, %v415
      %v584 = vmul.f32 %v582, %v416
      %v585 = vstv %s294
      %v586 = vmul.f32 %v585, %v435
      %v587 = vmul.f32 %v585, %v436
      %v588 = vadd.f32 %v583, %v586
      %v589 = vadd.f32 %v584, %v587
      %v590 = vstv %s295
      %v591 = vmul.f32 %v590, %v455
      %v592 = vmul.f32 %v590, %v456
      %v593 = vadd.f32 %v588, %v591
      %v594 = vadd.f32 %v589, %v592
      %v595 = vstv %s296
      %v596 = vmul.f32 %v595, %v261
      %v599 = vunpack.c.l.s4 1983009808
      %v600 = vunpack.c.0.s8 %v599
      %v601 = vlaneseq
      %v602 = vshrl.u32 %v601, 7
      %v603 = vsub.s32 %v600, %v602
      %v604 = vrot.slane %v596, %v603
      %v605 = vcombine.high %v604, %v604
      %v608 = vadd.f32 %v593, %v604
      %v609 = vadd.f32 %v594, %v605
      %v610 = vstv %s297
      %v611 = vmul.f32 %v610, %v475
      %v612 = vmul.f32 %v610, %v476
      %v613 = vadd.f32 %v608, %v611
      %v614 = vadd.f32 %v609, %v612
      %v615 = vstv %s298
      %v616 = vmul.f32 %v615, %v495
      %v617 = vmul.f32 %v615, %v496
      %v618 = vadd.f32 %v613, %v616
      %v619 = vadd.f32 %v614, %v617
      %v620 = vstv %s299
      %v621 = vmul.f32 %v620, %v515
      %v622 = vmul.f32 %v620, %v516
      %v623 = vadd.f32 %v618, %v621
      %v624 = vadd.f32 %v619, %v622
      %625 = vrot.lane.b32.xlu0 %v623, 32
      %v626 = vpop.permute.xlu0 %625
      %627 = vrot.lane.b32.xlu0 %v624, 32
      %v628 = vpop.permute.xlu0 %627
      %vm629 = vcmp.lt.s32.totalorder %v400, 32
      %v630 = vsel %vm629, %v626, %v628
      %v631 = vsel %vm629, %v628, %v626
      %v633 = vlaneseq
      %v634 = vshrl.u32 %v633, 7
      %v635 = vsub.s32 0, %v634
      %v636 = vrot.slane %v277, %v635
      %v637 = vlaneseq
      %v638 = vshrl.u32 %v637, 7
      %v639 = vsub.s32 1, %v638
      %v640 = vrot.slane %v277, %v639
      %v643 = vmul.f32 %v631, %v636
      %v644 = vmul.f32 %v630, %v640
      %v645 = vadd.f32 %v580, %v643
      %v646 = vadd.f32 %v581, %v644
      %v647 = vstv %s300
      %v648 = vmul.f32 %v647, %v415
      %v649 = vmul.f32 %v647, %v416
      %v650 = vstv %s301
      %v651 = vmul.f32 %v650, %v435
      %v652 = vmul.f32 %v650, %v436
      %v653 = vadd.f32 %v648, %v651
      %v654 = vadd.f32 %v649, %v652
      %v655 = vstv %s302
      %v656 = vmul.f32 %v655, %v455
      %v657 = vmul.f32 %v655, %v456
      %v658 = vadd.f32 %v653, %v656
      %v659 = vadd.f32 %v654, %v657
      %v660 = vstv %s303
      %v661 = vmul.f32 %v660, %v261
      %v664 = vunpack.c.l.s4 1983009808
      %v665 = vunpack.c.0.s8 %v664
      %v666 = vlaneseq
      %v667 = vshrl.u32 %v666, 7
      %v668 = vsub.s32 %v665, %v667
      %v669 = vrot.slane %v661, %v668
      %v670 = vcombine.high %v669, %v669
      %v673 = vadd.f32 %v658, %v669
      %v674 = vadd.f32 %v659, %v670
      %v675 = vstv %s304
      %v676 = vmul.f32 %v675, %v475
      %v677 = vmul.f32 %v675, %v476
      %v678 = vadd.f32 %v673, %v676
      %v679 = vadd.f32 %v674, %v677
      %v680 = vstv %s305
      %v681 = vmul.f32 %v680, %v495
      %v682 = vmul.f32 %v680, %v496
      %v683 = vadd.f32 %v678, %v681
      %v684 = vadd.f32 %v679, %v682
      %v685 = vstv %s306
      %v686 = vmul.f32 %v685, %v515
      %v687 = vmul.f32 %v685, %v516
      %v688 = vadd.f32 %v683, %v686
      %v689 = vadd.f32 %v684, %v687
      %690 = vrot.lane.b32.xlu0 %v688, 16
      %v691 = vpop.permute.xlu0 %690
      %692 = vrot.lane.b32.xlu0 %v689, 16
      %v693 = vpop.permute.xlu0 %692
      %vm694 = vcmp.lt.s32.totalorder %v400, 16
      %v695 = vsel %vm694, %v691, %v693
      %v696 = vsel %vm694, %v693, %v691
      %v698 = vlaneseq
      %v699 = vshrl.u32 %v698, 7
      %v700 = vsub.s32 0, %v699
      %v701 = vrot.slane %v279, %v700
      %v702 = vlaneseq
      %v703 = vshrl.u32 %v702, 7
      %v704 = vsub.s32 1, %v703
      %v705 = vrot.slane %v279, %v704
      %v708 = vmul.f32 %v696, %v701
      %v709 = vmul.f32 %v695, %v705
      %v710 = vadd.f32 %v645, %v708
      %v711 = vadd.f32 %v646, %v709
      %v712 = vstv %s307
      %v713 = vmul.f32 %v712, %v415
      %v714 = vmul.f32 %v712, %v416
      %v715 = vstv %s308
      %v716 = vmul.f32 %v715, %v435
      %v717 = vmul.f32 %v715, %v436
      %v718 = vadd.f32 %v713, %v716
      %v719 = vadd.f32 %v714, %v717
      %v720 = vstv %s309
      %v721 = vmul.f32 %v720, %v455
      %v722 = vmul.f32 %v720, %v456
      %v723 = vadd.f32 %v718, %v721
      %v724 = vadd.f32 %v719, %v722
      %v725 = vstv %s310
      %v726 = vmul.f32 %v725, %v261
      %v729 = vunpack.c.l.s4 1983009808
      %v730 = vunpack.c.0.s8 %v729
      %v731 = vlaneseq
      %v732 = vshrl.u32 %v731, 7
      %v733 = vsub.s32 %v730, %v732
      %v734 = vrot.slane %v726, %v733
      %v735 = vcombine.high %v734, %v734
      %v738 = vadd.f32 %v723, %v734
      %v739 = vadd.f32 %v724, %v735
      %v740 = vstv %s311
      %v741 = vmul.f32 %v740, %v475
      %v742 = vmul.f32 %v740, %v476
      %v743 = vadd.f32 %v738, %v741
      %v744 = vadd.f32 %v739, %v742
      %v745 = vstv %s312
      %v746 = vmul.f32 %v745, %v495
      %v747 = vmul.f32 %v745, %v496
      %v748 = vadd.f32 %v743, %v746
      %v749 = vadd.f32 %v744, %v747
      %v750 = vstv %s313
      %v751 = vmul.f32 %v750, %v515
      %v752 = vmul.f32 %v750, %v516
      %v753 = vadd.f32 %v748, %v751
      %v754 = vadd.f32 %v749, %v752
      %v755 = vadd.f32 %v710, %v753
      %v756 = vadd.f32 %v711, %v754
      %v757 = vstv %s314
      %v758 = vmul.f32 %v757, %v415
      %v759 = vmul.f32 %v757, %v416
      %v760 = vstv %s315
      %v761 = vmul.f32 %v760, %v435
      %v762 = vmul.f32 %v760, %v436
      %v763 = vadd.f32 %v758, %v761
      %v764 = vadd.f32 %v759, %v762
      %v765 = vstv %s316
      %v766 = vmul.f32 %v765, %v455
      %v767 = vmul.f32 %v765, %v456
      %v768 = vadd.f32 %v763, %v766
      %v769 = vadd.f32 %v764, %v767
      %v770 = vstv %s317
      %v771 = vmul.f32 %v770, %v261
      %v774 = vunpack.c.l.s4 1983009808
      %v775 = vunpack.c.0.s8 %v774
      %v776 = vlaneseq
      %v777 = vshrl.u32 %v776, 7
      %v778 = vsub.s32 %v775, %v777
      %v779 = vrot.slane %v771, %v778
      %v780 = vcombine.high %v779, %v779
      %v783 = vadd.f32 %v768, %v779
      %v784 = vadd.f32 %v769, %v780
      %v785 = vstv %s318
      %v786 = vmul.f32 %v785, %v475
      %v787 = vmul.f32 %v785, %v476
      %v788 = vadd.f32 %v783, %v786
      %v789 = vadd.f32 %v784, %v787
      %v790 = vstv %s319
      %v791 = vmul.f32 %v790, %v495
      %v792 = vmul.f32 %v790, %v496
      %v793 = vadd.f32 %v788, %v791
      %v794 = vadd.f32 %v789, %v792
      %v795 = vstv %s320
      %v796 = vmul.f32 %v795, %v515
      %v797 = vmul.f32 %v795, %v516
      %v798 = vadd.f32 %v793, %v796
      %v799 = vadd.f32 %v794, %v797
      %800 = vrot.lane.b32.xlu0 %v798, 112
      %v801 = vpop.permute.xlu0 %800
      %802 = vrot.lane.b32.xlu0 %v799, 112
      %v803 = vpop.permute.xlu0 %802
      %vm804 = vcmp.lt.s32.totalorder %v400, 112
      %v805 = vsel %vm804, %v801, %v803
      %v806 = vsel %vm804, %v803, %v801
      %v808 = vlaneseq
      %v809 = vshrl.u32 %v808, 7
      %v810 = vsub.s32 0, %v809
      %v811 = vrot.slane %v281, %v810
      %v812 = vlaneseq
      %v813 = vshrl.u32 %v812, 7
      %v814 = vsub.s32 1, %v813
      %v815 = vrot.slane %v281, %v814
      %v818 = vmul.f32 %v805, %v811
      %v819 = vmul.f32 %v806, %v815
      %v820 = vadd.f32 %v755, %v818
      %v821 = vadd.f32 %v756, %v819
      %v822 = vstv %s321
      %v823 = vmul.f32 %v822, %v415
      %v824 = vmul.f32 %v822, %v416
      %v825 = vstv %s322
      %v826 = vmul.f32 %v825, %v435
      %v827 = vmul.f32 %v825, %v436
      %v828 = vadd.f32 %v823, %v826
      %v829 = vadd.f32 %v824, %v827
      %v830 = vstv %s323
      %v831 = vmul.f32 %v830, %v455
      %v832 = vmul.f32 %v830, %v456
      %v833 = vadd.f32 %v828, %v831
      %v834 = vadd.f32 %v829, %v832
      %v835 = vstv %s324
      %v836 = vmul.f32 %v835, %v261
      %v839 = vunpack.c.l.s4 1983009808
      %v840 = vunpack.c.0.s8 %v839
      %v841 = vlaneseq
      %v842 = vshrl.u32 %v841, 7
      %v843 = vsub.s32 %v840, %v842
      %v844 = vrot.slane %v836, %v843
      %v845 = vcombine.high %v844, %v844
      %v848 = vadd.f32 %v833, %v844
      %v849 = vadd.f32 %v834, %v845
      %v850 = vstv %s325
      %v851 = vmul.f32 %v850, %v475
      %v852 = vmul.f32 %v850, %v476
      %v853 = vadd.f32 %v848, %v851
      %v854 = vadd.f32 %v849, %v852
      %v855 = vstv %s326
      %v856 = vmul.f32 %v855, %v495
      %v857 = vmul.f32 %v855, %v496
      %v858 = vadd.f32 %v853, %v856
      %v859 = vadd.f32 %v854, %v857
      %v860 = vstv %s327
      %v861 = vmul.f32 %v860, %v515
      %v862 = vmul.f32 %v860, %v516
      %v863 = vadd.f32 %v858, %v861
      %v864 = vadd.f32 %v859, %v862
      %865 = vrot.lane.b32.xlu0 %v863, 96
      %v866 = vpop.permute.xlu0 %865
      %867 = vrot.lane.b32.xlu0 %v864, 96
      %v868 = vpop.permute.xlu0 %867
      %vm869 = vcmp.lt.s32.totalorder %v400, 96
      %v870 = vsel %vm869, %v866, %v868
      %v871 = vsel %vm869, %v868, %v866
      %v873 = vlaneseq
      %v874 = vshrl.u32 %v873, 7
      %v875 = vsub.s32 0, %v874
      %v876 = vrot.slane %v283, %v875
      %v877 = vlaneseq
      %v878 = vshrl.u32 %v877, 7
      %v879 = vsub.s32 1, %v878
      %v880 = vrot.slane %v283, %v879
      %v883 = vmul.f32 %v870, %v876
      %v884 = vmul.f32 %v871, %v880
      %v885 = vadd.f32 %v820, %v883
      %v886 = vadd.f32 %v821, %v884
      %v887 = vstv %s328
      %v888 = vmul.f32 %v887, %v415
      %v889 = vmul.f32 %v887, %v416
      %v890 = vstv %s329
      %v891 = vmul.f32 %v890, %v435
      %v892 = vmul.f32 %v890, %v436
      %v893 = vadd.f32 %v888, %v891
      %v894 = vadd.f32 %v889, %v892
      %v895 = vstv %s330
      %v896 = vmul.f32 %v895, %v455
      %v897 = vmul.f32 %v895, %v456
      %v898 = vadd.f32 %v893, %v896
      %v899 = vadd.f32 %v894, %v897
      %v900 = vstv %s331
      %v901 = vmul.f32 %v900, %v261
      %v904 = vunpack.c.l.s4 1983009808
      %v905 = vunpack.c.0.s8 %v904
      %v906 = vlaneseq
      %v907 = vshrl.u32 %v906, 7
      %v908 = vsub.s32 %v905, %v907
      %v909 = vrot.slane %v901, %v908
      %v910 = vcombine.high %v909, %v909
      %v913 = vadd.f32 %v898, %v909
      %v914 = vadd.f32 %v899, %v910
      %v915 = vstv %s332
      %v916 = vmul.f32 %v915, %v475
      %v917 = vmul.f32 %v915, %v476
      %v918 = vadd.f32 %v913, %v916
      %v919 = vadd.f32 %v914, %v917
      %v920 = vstv %s333
      %v921 = vmul.f32 %v920, %v495
      %v922 = vmul.f32 %v920, %v496
      %v923 = vadd.f32 %v918, %v921
      %v924 = vadd.f32 %v919, %v922
      %v925 = vstv %s334
      %v926 = vmul.f32 %v925, %v515
      %v927 = vmul.f32 %v925, %v516
      %v928 = vadd.f32 %v923, %v926
      %v929 = vadd.f32 %v924, %v927
      %930 = vrot.lane.b32.xlu0 %v928, 80
      %v931 = vpop.permute.xlu0 %930
      %932 = vrot.lane.b32.xlu0 %v929, 80
      %v933 = vpop.permute.xlu0 %932
      %vm934 = vcmp.lt.s32.totalorder %v400, 80
      %v935 = vsel %vm934, %v931, %v933
      %v936 = vsel %vm934, %v933, %v931
      %v938 = vlaneseq
      %v939 = vshrl.u32 %v938, 7
      %v940 = vsub.s32 0, %v939
      %v941 = vrot.slane %v285, %v940
      %v942 = vlaneseq
      %v943 = vshrl.u32 %v942, 7
      %v944 = vsub.s32 1, %v943
      %v945 = vrot.slane %v285, %v944
      %v948 = vmul.f32 %v935, %v941
      %v949 = vmul.f32 %v936, %v945
      %v950 = vadd.f32 %v885, %v948
      %v951 = vadd.f32 %v886, %v949
      %v954 = vunpack.c.l.s4 1983009808
      %v955 = vunpack.c.0.s8 %v954
      %v956 = vlaneseq
      %v957 = vshrl.u32 %v956, 7
      %v958 = vsub.s32 %v955, %v957
      %v959 = vrot.slane %v262, %v958
      %v960 = vcombine.high %v959, %v959
      %963 = vrot.lane.b32.xlu0 %v959, 3
      %v964 = vpop.permute.xlu0 %963
      %965 = vrot.lane.b32.xlu0 %v960, 3
      %v966 = vpop.permute.xlu0 %965
      %v967 = vsel %vm401, %v964, %v966
      %v968 = vsel %vm401, %v966, %v964
      %v969 = vmul.f32 %v968, %v408
      %v970 = vmul.f32 %v967, %v412
      %971 = vrot.lane.b32.xlu0 %v959, 2
      %v972 = vpop.permute.xlu0 %971
      %973 = vrot.lane.b32.xlu0 %v960, 2
      %v974 = vpop.permute.xlu0 %973
      %v975 = vsel %vm421, %v972, %v974
      %v976 = vsel %vm421, %v974, %v972
      %v977 = vmul.f32 %v976, %v428
      %v978 = vmul.f32 %v975, %v432
      %979 = vrot.lane.b32.xlu0 %v959, 1
      %v980 = vpop.permute.xlu0 %979
      %981 = vrot.lane.b32.xlu0 %v960, 1
      %v982 = vpop.permute.xlu0 %981
      %v983 = vsel %vm441, %v980, %v982
      %v984 = vsel %vm441, %v982, %v980
      %v985 = vmul.f32 %v984, %v448
      %v986 = vmul.f32 %v983, %v452
      %987 = vrot.lane.b32.xlu0 %v959, 127
      %v988 = vpop.permute.xlu0 %987
      %989 = vrot.lane.b32.xlu0 %v960, 127
      %v990 = vpop.permute.xlu0 %989
      %v991 = vsel %vm461, %v988, %v990
      %v992 = vsel %vm461, %v990, %v988
      %v993 = vmul.f32 %v991, %v468
      %v994 = vmul.f32 %v992, %v472
      %995 = vrot.lane.b32.xlu0 %v959, 126
      %v996 = vpop.permute.xlu0 %995
      %997 = vrot.lane.b32.xlu0 %v960, 126
      %v998 = vpop.permute.xlu0 %997
      %v999 = vsel %vm481, %v996, %v998
      %v1000 = vsel %vm481, %v998, %v996
      %v1001 = vmul.f32 %v999, %v488
      %v1002 = vmul.f32 %v1000, %v492
      %1003 = vrot.lane.b32.xlu0 %v959, 125
      %v1004 = vpop.permute.xlu0 %1003
      %1005 = vrot.lane.b32.xlu0 %v960, 125
      %v1006 = vpop.permute.xlu0 %1005
      %v1007 = vsel %vm501, %v1004, %v1006
      %v1008 = vsel %vm501, %v1006, %v1004
      %v1009 = vmul.f32 %v1007, %v508
      %v1010 = vmul.f32 %v1008, %v512
      %v1011 = vstv %s335
      %v1012 = vmul.f32 %v1011, %v969
      %v1013 = vmul.f32 %v1011, %v970
      %v1014 = vstv %s336
      %v1015 = vmul.f32 %v1014, %v977
      %v1016 = vmul.f32 %v1014, %v978
      %v1017 = vadd.f32 %v1012, %v1015
      %v1018 = vadd.f32 %v1013, %v1016
      %v1019 = vstv %s337
      %v1020 = vmul.f32 %v1019, %v985
      %v1021 = vmul.f32 %v1019, %v986
      %v1022 = vadd.f32 %v1017, %v1020
      %v1023 = vadd.f32 %v1018, %v1021
      %v1024 = vstv %s338
      %v1025 = vmul.f32 %v1024, %v262
      %v1028 = vunpack.c.l.s4 1983009808
      %v1029 = vunpack.c.0.s8 %v1028
      %v1030 = vlaneseq
      %v1031 = vshrl.u32 %v1030, 7
      %v1032 = vsub.s32 %v1029, %v1031
      %v1033 = vrot.slane %v1025, %v1032
      %v1034 = vcombine.high %v1033, %v1033
      %v1037 = vadd.f32 %v1022, %v1033
      %v1038 = vadd.f32 %v1023, %v1034
      %v1039 = vstv %s339
      %v1040 = vmul.f32 %v1039, %v993
      %v1041 = vmul.f32 %v1039, %v994
      %v1042 = vadd.f32 %v1037, %v1040
      %v1043 = vadd.f32 %v1038, %v1041
      %v1044 = vstv %s340
      %v1045 = vmul.f32 %v1044, %v1001
      %v1046 = vmul.f32 %v1044, %v1002
      %v1047 = vadd.f32 %v1042, %v1045
      %v1048 = vadd.f32 %v1043, %v1046
      %v1049 = vstv %s341
      %v1050 = vmul.f32 %v1049, %v1009
      %v1051 = vmul.f32 %v1049, %v1010
      %v1052 = vadd.f32 %v1047, %v1050
      %v1053 = vadd.f32 %v1048, %v1051
      %1054 = vrot.lane.b32.xlu0 %v1052, 48
      %v1055 = vpop.permute.xlu0 %1054
      %1056 = vrot.lane.b32.xlu0 %v1053, 48
      %v1057 = vpop.permute.xlu0 %1056
      %v1058 = vsel %vm564, %v1055, %v1057
      %v1059 = vsel %vm564, %v1057, %v1055
      %v1060 = vmul.f32 %v1059, %v571
      %v1061 = vmul.f32 %v1058, %v575
      %v1062 = vadd.f32 %v950, %v1060
      %v1063 = vadd.f32 %v951, %v1061
      %v1064 = vstv %s342
      %v1065 = vmul.f32 %v1064, %v969
      %v1066 = vmul.f32 %v1064, %v970
      %v1067 = vstv %s343
      %v1068 = vmul.f32 %v1067, %v977
      %v1069 = vmul.f32 %v1067, %v978
      %v1070 = vadd.f32 %v1065, %v1068
      %v1071 = vadd.f32 %v1066, %v1069
      %v1072 = vstv %s344
      %v1073 = vmul.f32 %v1072, %v985
      %v1074 = vmul.f32 %v1072, %v986
      %v1075 = vadd.f32 %v1070, %v1073
      %v1076 = vadd.f32 %v1071, %v1074
      %v1077 = vstv %s345
      %v1078 = vmul.f32 %v1077, %v262
      %v1081 = vunpack.c.l.s4 1983009808
      %v1082 = vunpack.c.0.s8 %v1081
      %v1083 = vlaneseq
      %v1084 = vshrl.u32 %v1083, 7
      %v1085 = vsub.s32 %v1082, %v1084
      %v1086 = vrot.slane %v1078, %v1085
      %v1087 = vcombine.high %v1086, %v1086
      %v1090 = vadd.f32 %v1075, %v1086
      %v1091 = vadd.f32 %v1076, %v1087
      %v1092 = vstv %s346
      %v1093 = vmul.f32 %v1092, %v993
      %v1094 = vmul.f32 %v1092, %v994
      %v1095 = vadd.f32 %v1090, %v1093
      %v1096 = vadd.f32 %v1091, %v1094
      %v1097 = vstv %s347
      %v1098 = vmul.f32 %v1097, %v1001
      %v1099 = vmul.f32 %v1097, %v1002
      %v1100 = vadd.f32 %v1095, %v1098
      %v1101 = vadd.f32 %v1096, %v1099
      %v1102 = vstv %s348
      %v1103 = vmul.f32 %v1102, %v1009
      %v1104 = vmul.f32 %v1102, %v1010
      %v1105 = vadd.f32 %v1100, %v1103
      %v1106 = vadd.f32 %v1101, %v1104
      %1107 = vrot.lane.b32.xlu0 %v1105, 32
      %v1108 = vpop.permute.xlu0 %1107
      %1109 = vrot.lane.b32.xlu0 %v1106, 32
      %v1110 = vpop.permute.xlu0 %1109
      %v1111 = vsel %vm629, %v1108, %v1110
      %v1112 = vsel %vm629, %v1110, %v1108
      %v1113 = vmul.f32 %v1112, %v636
      %v1114 = vmul.f32 %v1111, %v640
      %v1115 = vadd.f32 %v1062, %v1113
      %v1116 = vadd.f32 %v1063, %v1114
      %v1117 = vstv %s349
      %v1118 = vmul.f32 %v1117, %v969
      %v1119 = vmul.f32 %v1117, %v970
      %v1120 = vstv %s350
      %v1121 = vmul.f32 %v1120, %v977
      %v1122 = vmul.f32 %v1120, %v978
      %v1123 = vadd.f32 %v1118, %v1121
      %v1124 = vadd.f32 %v1119, %v1122
      %v1125 = vstv %s351
      %v1126 = vmul.f32 %v1125, %v985
      %v1127 = vmul.f32 %v1125, %v986
      %v1128 = vadd.f32 %v1123, %v1126
      %v1129 = vadd.f32 %v1124, %v1127
      %v1130 = vstv %s352
      %v1131 = vmul.f32 %v1130, %v262
      %v1134 = vunpack.c.l.s4 1983009808
      %v1135 = vunpack.c.0.s8 %v1134
      %v1136 = vlaneseq
      %v1137 = vshrl.u32 %v1136, 7
      %v1138 = vsub.s32 %v1135, %v1137
      %v1139 = vrot.slane %v1131, %v1138
      %v1140 = vcombine.high %v1139, %v1139
      %v1143 = vadd.f32 %v1128, %v1139
      %v1144 = vadd.f32 %v1129, %v1140
      %v1145 = vstv %s353
      %v1146 = vmul.f32 %v1145, %v993
      %v1147 = vmul.f32 %v1145, %v994
      %v1148 = vadd.f32 %v1143, %v1146
      %v1149 = vadd.f32 %v1144, %v1147
      %v1150 = vstv %s354
      %v1151 = vmul.f32 %v1150, %v1001
      %v1152 = vmul.f32 %v1150, %v1002
      %v1153 = vadd.f32 %v1148, %v1151
      %v1154 = vadd.f32 %v1149, %v1152
      %v1155 = vstv %s355
      %v1156 = vmul.f32 %v1155, %v1009
      %v1157 = vmul.f32 %v1155, %v1010
      %v1158 = vadd.f32 %v1153, %v1156
      %v1159 = vadd.f32 %v1154, %v1157
      %1160 = vrot.lane.b32.xlu0 %v1158, 16
      %v1161 = vpop.permute.xlu0 %1160
      %1162 = vrot.lane.b32.xlu0 %v1159, 16
      %v1163 = vpop.permute.xlu0 %1162
      %v1164 = vsel %vm694, %v1161, %v1163
      %v1165 = vsel %vm694, %v1163, %v1161
      %v1166 = vmul.f32 %v1165, %v701
      %v1167 = vmul.f32 %v1164, %v705
      %v1168 = vadd.f32 %v1115, %v1166
      %v1169 = vadd.f32 %v1116, %v1167
      %v1170 = vstv %s356
      %v1171 = vmul.f32 %v1170, %v969
      %v1172 = vmul.f32 %v1170, %v970
      %v1173 = vstv %s357
      %v1174 = vmul.f32 %v1173, %v977
      %v1175 = vmul.f32 %v1173, %v978
      %v1176 = vadd.f32 %v1171, %v1174
      %v1177 = vadd.f32 %v1172, %v1175
      %v1178 = vstv %s358
      %v1179 = vmul.f32 %v1178, %v985
      %v1180 = vmul.f32 %v1178, %v986
      %v1181 = vadd.f32 %v1176, %v1179
      %v1182 = vadd.f32 %v1177, %v1180
      %v1183 = vstv %s359
      %v1184 = vmul.f32 %v1183, %v262
      %v1187 = vunpack.c.l.s4 1983009808
      %v1188 = vunpack.c.0.s8 %v1187
      %v1189 = vlaneseq
      %v1190 = vshrl.u32 %v1189, 7
      %v1191 = vsub.s32 %v1188, %v1190
      %v1192 = vrot.slane %v1184, %v1191
      %v1193 = vcombine.high %v1192, %v1192
      %v1196 = vadd.f32 %v1181, %v1192
      %v1197 = vadd.f32 %v1182, %v1193
      %v1198 = vstv %s360
      %v1199 = vmul.f32 %v1198, %v993
      %v1200 = vmul.f32 %v1198, %v994
      %v1201 = vadd.f32 %v1196, %v1199
      %v1202 = vadd.f32 %v1197, %v1200
      %v1203 = vstv %s361
      %v1204 = vmul.f32 %v1203, %v1001
      %v1205 = vmul.f32 %v1203, %v1002
      %v1206 = vadd.f32 %v1201, %v1204
      %v1207 = vadd.f32 %v1202, %v1205
      %v1208 = vstv %s362
      %v1209 = vmul.f32 %v1208, %v1009
      %v1210 = vmul.f32 %v1208, %v1010
      %v1211 = vadd.f32 %v1206, %v1209
      %v1212 = vadd.f32 %v1207, %v1210
      %v1213 = vadd.f32 %v1168, %v1211
      %v1214 = vadd.f32 %v1169, %v1212
      %v1215 = vstv %s363
      %v1216 = vmul.f32 %v1215, %v969
      %v1217 = vmul.f32 %v1215, %v970
      %v1218 = vstv %s364
      %v1219 = vmul.f32 %v1218, %v977
      %v1220 = vmul.f32 %v1218, %v978
      %v1221 = vadd.f32 %v1216, %v1219
      %v1222 = vadd.f32 %v1217, %v1220
      %v1223 = vstv %s365
      %v1224 = vmul.f32 %v1223, %v985
      %v1225 = vmul.f32 %v1223, %v986
      %v1226 = vadd.f32 %v1221, %v1224
      %v1227 = vadd.f32 %v1222, %v1225
      %v1228 = vstv %s366
      %v1229 = vmul.f32 %v1228, %v262
      %v1232 = vunpack.c.l.s4 1983009808
      %v1233 = vunpack.c.0.s8 %v1232
      %v1234 = vlaneseq
      %v1235 = vshrl.u32 %v1234, 7
      %v1236 = vsub.s32 %v1233, %v1235
      %v1237 = vrot.slane %v1229, %v1236
      %v1238 = vcombine.high %v1237, %v1237
      %v1241 = vadd.f32 %v1226, %v1237
      %v1242 = vadd.f32 %v1227, %v1238
      %v1243 = vstv %s367
      %v1244 = vmul.f32 %v1243, %v993
      %v1245 = vmul.f32 %v1243, %v994
      %v1246 = vadd.f32 %v1241, %v1244
      %v1247 = vadd.f32 %v1242, %v1245
      %v1248 = vstv %s368
      %v1249 = vmul.f32 %v1248, %v1001
      %v1250 = vmul.f32 %v1248, %v1002
      %v1251 = vadd.f32 %v1246, %v1249
      %v1252 = vadd.f32 %v1247, %v1250
      %v1253 = vstv %s369
      %v1254 = vmul.f32 %v1253, %v1009
      %v1255 = vmul.f32 %v1253, %v1010
      %v1256 = vadd.f32 %v1251, %v1254
      %v1257 = vadd.f32 %v1252, %v1255
      %1258 = vrot.lane.b32.xlu0 %v1256, 112
      %v1259 = vpop.permute.xlu0 %1258
      %1260 = vrot.lane.b32.xlu0 %v1257, 112
      %v1261 = vpop.permute.xlu0 %1260
      %v1262 = vsel %vm804, %v1259, %v1261
      %v1263 = vsel %vm804, %v1261, %v1259
      %v1264 = vmul.f32 %v1262, %v811
      %v1265 = vmul.f32 %v1263, %v815
      %v1266 = vadd.f32 %v1213, %v1264
      %v1267 = vadd.f32 %v1214, %v1265
      %v1268 = vstv %s370
      %v1269 = vmul.f32 %v1268, %v969
      %v1270 = vmul.f32 %v1268, %v970
      %v1271 = vstv %s371
      %v1272 = vmul.f32 %v1271, %v977
      %v1273 = vmul.f32 %v1271, %v978
      %v1274 = vadd.f32 %v1269, %v1272
      %v1275 = vadd.f32 %v1270, %v1273
      %v1276 = vstv %s372
      %v1277 = vmul.f32 %v1276, %v985
      %v1278 = vmul.f32 %v1276, %v986
      %v1279 = vadd.f32 %v1274, %v1277
      %v1280 = vadd.f32 %v1275, %v1278
      %v1281 = vstv %s373
      %v1282 = vmul.f32 %v1281, %v262
      %v1285 = vunpack.c.l.s4 1983009808
      %v1286 = vunpack.c.0.s8 %v1285
      %v1287 = vlaneseq
      %v1288 = vshrl.u32 %v1287, 7
      %v1289 = vsub.s32 %v1286, %v1288
      %v1290 = vrot.slane %v1282, %v1289
      %v1291 = vcombine.high %v1290, %v1290
      %v1294 = vadd.f32 %v1279, %v1290
      %v1295 = vadd.f32 %v1280, %v1291
      %v1296 = vstv %s374
      %v1297 = vmul.f32 %v1296, %v993
      %v1298 = vmul.f32 %v1296, %v994
      %v1299 = vadd.f32 %v1294, %v1297
      %v1300 = vadd.f32 %v1295, %v1298
      %v1301 = vstv %s375
      %v1302 = vmul.f32 %v1301, %v1001
      %v1303 = vmul.f32 %v1301, %v1002
      %v1304 = vadd.f32 %v1299, %v1302
      %v1305 = vadd.f32 %v1300, %v1303
      %v1306 = vstv %s376
      %v1307 = vmul.f32 %v1306, %v1009
      %v1308 = vmul.f32 %v1306, %v1010
      %v1309 = vadd.f32 %v1304, %v1307
      %v1310 = vadd.f32 %v1305, %v1308
      %1311 = vrot.lane.b32.xlu0 %v1309, 96
      %v1312 = vpop.permute.xlu0 %1311
      %1313 = vrot.lane.b32.xlu0 %v1310, 96
      %v1314 = vpop.permute.xlu0 %1313
      %v1315 = vsel %vm869, %v1312, %v1314
      %v1316 = vsel %vm869, %v1314, %v1312
      %v1317 = vmul.f32 %v1315, %v876
      %v1318 = vmul.f32 %v1316, %v880
      %v1319 = vadd.f32 %v1266, %v1317
      %v1320 = vadd.f32 %v1267, %v1318
      %v1321 = vstv %s377
      %v1322 = vmul.f32 %v1321, %v969
      %v1323 = vmul.f32 %v1321, %v970
      %v1324 = vstv %s378
      %v1325 = vmul.f32 %v1324, %v977
      %v1326 = vmul.f32 %v1324, %v978
      %v1327 = vadd.f32 %v1322, %v1325
      %v1328 = vadd.f32 %v1323, %v1326
      %v1329 = vstv %s379
      %v1330 = vmul.f32 %v1329, %v985
      %v1331 = vmul.f32 %v1329, %v986
      %v1332 = vadd.f32 %v1327, %v1330
      %v1333 = vadd.f32 %v1328, %v1331
      %v1334 = vstv %s380
      %v1335 = vmul.f32 %v1334, %v262
      %v1338 = vunpack.c.l.s4 1983009808
      %v1339 = vunpack.c.0.s8 %v1338
      %v1340 = vlaneseq
      %v1341 = vshrl.u32 %v1340, 7
      %v1342 = vsub.s32 %v1339, %v1341
      %v1343 = vrot.slane %v1335, %v1342
      %v1344 = vcombine.high %v1343, %v1343
      %v1347 = vadd.f32 %v1332, %v1343
      %v1348 = vadd.f32 %v1333, %v1344
      %v1349 = vstv %s381
      %v1350 = vmul.f32 %v1349, %v993
      %v1351 = vmul.f32 %v1349, %v994
      %v1352 = vadd.f32 %v1347, %v1350
      %v1353 = vadd.f32 %v1348, %v1351
      %v1354 = vstv %s382
      %v1355 = vmul.f32 %v1354, %v1001
      %v1356 = vmul.f32 %v1354, %v1002
      %v1357 = vadd.f32 %v1352, %v1355
      %v1358 = vadd.f32 %v1353, %v1356
      %v1359 = vstv %s383
      %v1360 = vmul.f32 %v1359, %v1009
      %v1361 = vmul.f32 %v1359, %v1010
      %v1362 = vadd.f32 %v1357, %v1360
      %v1363 = vadd.f32 %v1358, %v1361
      %1364 = vrot.lane.b32.xlu0 %v1362, 80
      %v1365 = vpop.permute.xlu0 %1364
      %1366 = vrot.lane.b32.xlu0 %v1363, 80
      %v1367 = vpop.permute.xlu0 %1366
      %v1368 = vsel %vm934, %v1365, %v1367
      %v1369 = vsel %vm934, %v1367, %v1365
      %v1370 = vmul.f32 %v1368, %v941
      %v1371 = vmul.f32 %v1369, %v945
      %v1372 = vadd.f32 %v1319, %v1370
      %v1373 = vadd.f32 %v1320, %v1371
      %v1374 = vxor.u32 %v1372, 2147483648
      %v1375 = vxor.u32 %v1373, 2147483648
      %v1376 = vmul.f32 %v1374, 1.442695
      %v1377 = vpow.pop %v1376
      %v1378 = vmul.f32 %v1375, 1.442695
      %v1379 = vpow.pop %v1378
      %v1380 = vadd.f32 %v1377, 1.0
      %v1381 = vadd.f32 %v1379, 1.0
      %v1382 = vrcp.pop %v1380
      %v1383 = vmul.f32 1.0, %v1382
      %v1384 = vrcp.pop %v1381
      %v1385 = vmul.f32 1.0, %v1384
      %v1388 = vcombine.low %v1383, %v1385
      %v1390 = vunpack.c.l.s4 1983009808
      %v1391 = vunpack.c.0.s8 %v1390
      %v1392 = vlaneseq
      %v1393 = vshrl.u32 %v1392, 7
      %v1394 = vsub.s32 %v1391, %v1393
      %v1395 = vrot.slane %v1388, %v1394
      %1397 = vst [vmem:[#allocation11] sm:$0xf] %v1395
    $region37: #{tpu_custom_call.1} parent=1 // pred_fallthru
      _
    // Predicated region
    $region38: #{tpu_custom_call.1} parent=1 // pred_check
      _
    $region39: #{tpu_custom_call.1} parent=1 // pred_check_branch
      %1399 = sbr.rel (0) target = $region41
    $region40: #{tpu_custom_call.1} parent=1 // pred_region
      %s1401 = ssub.s32 64, 64
      %1402 = vsyncadd [#allocation6], %s1401
      %s1404 = sshll.u32 [#allocation11], 4
      %s1405 = int_to_ptr.vmem [resolvable:$true] %s1404
      %1407 = dma.vmem_to_hbm [thread:$0]  %s1405, 64, %s3, [#allocation6]
    $region41: #{tpu_custom_call.1} parent=1 // pred_fallthru
      _
    // Predicated region
    $region42: #{tpu_custom_call.1} parent=1 // pred_check
      _
    $region43: #{tpu_custom_call.1} parent=1 // pred_check_branch
      %1409 = sbr.rel (0) target = $region45
    $region44: #{tpu_custom_call.1} parent=1 // pred_region
      %1410 = dma.done [#allocation6], 64
    $region45: #{tpu_custom_call.1} parent=1 // pred_fallthru
      _
    %1411 = vsyncpa [#allocation5], 1
    %1412 = vsyncpa [#allocation10], 1
    %1413 = vsyncpa [#allocation6], 1
    %1414 = vsyncpa [#allocation7], 1

</llo_original>
